<compile_context>
chip_gen: v5e
topology: v5e:2x2
jax: 0.10.0
libtpu: 0.0.40
codegen_flags: <defaults>
</compile_context>

<pallas_src>
import functools
import math

import jax
import jax.numpy as jnp
from jax import lax
from jax.experimental import pallas as pl
from jax.experimental.pallas import tpu as pltpu


VOCAB = 100
HIDDEN = 32
NUM_LAYERS = 2
NUM_HEADS = 4
HEAD_DIM = HIDDEN // NUM_HEADS
INTERMEDIATE = 128
MAX_POS = 64
TYPE_VOCAB = 2
NUM_LABELS = 3
LN_EPS = 1e-12
VEC_PAD = max(3 * HIDDEN, INTERMEDIATE)   # per-layer packed-vector slab width


def _layernorm(x, g, b, eps):
    mean = jnp.mean(x, axis=-1, keepdims=True)
    var = jnp.mean(jnp.square(x - mean), axis=-1, keepdims=True)
    return (x - mean) * lax.rsqrt(var + eps) * g + b


# ----------------------------------------------------------------------------
# Fused kernel: embedding LN + all transformer layers + pooler + classifier
# ----------------------------------------------------------------------------

def _finbert_kernel(emb_ref, kbias_ref, embln_ref,
                    wqkv_ref, wo_ref, wi_ref, wo2_ref, vec_ref,
                    pw_ref, pb_ref, cw_ref, cb_ref,
                    hid_ref, logits_ref,
                    *, batch, seq, num_heads, head_dim, eps):
    l = pl.program_id(0)
    hidden = num_heads * head_dim

    # grid step 0: embedding LayerNorm, written straight into the resident carry.
    @pl.when(l == 0)
    def _():
        hid_ref[...] = _layernorm(emb_ref[...], embln_ref[0:1, :],
                                  embln_ref[1:2, :], eps)

    x = hid_ref[...]                              # activation carried across layers

    # --- unpack the per-layer vector slab [8, VEC_PAD] ---
    vec = vec_ref[0]
    inter = wi_ref.shape[-1]
    bqkv = vec[0:1, :3 * hidden]
    bo   = vec[1:2, :hidden]
    g1   = vec[2:3, :hidden]
    b1   = vec[3:4, :hidden]
    bi   = vec[4:5, :inter]
    bo2  = vec[5:6, :hidden]
    g2   = vec[6:7, :hidden]
    b2   = vec[7:8, :hidden]

    # --- self-attention: packed QKV matmul, per-batch per-head softmax ---
    # (1/sqrt(head_dim) is already folded into Wq/bq)
    qkv = jnp.dot(x, wqkv_ref[0], preferred_element_type=jnp.float32) + bqkv

    ctx_rows = []
    for b in range(batch):                        # static unroll (B=2)
        r0 = b * seq
        q_b = qkv[r0:r0 + seq, 0:hidden]
        k_bT = qkv[r0:r0 + seq, hidden:2 * hidden].T   # one transpose per batch
        v_b = qkv[r0:r0 + seq, 2 * hidden:3 * hidden]
        kbias = kbias_ref[b:b + 1, :]             # [1, S] additive key-pad bias
        heads = []
        for h in range(num_heads):                # static unroll (NUM_HEADS=4)
            lo = h * head_dim
            s = jnp.dot(q_b[:, lo:lo + head_dim], k_bT[lo:lo + head_dim, :],
                        preferred_element_type=jnp.float32) + kbias
            m = jnp.max(s, axis=-1, keepdims=True)
            p = jnp.exp(s - m)
            p = p * pl.reciprocal(jnp.sum(p, axis=-1, keepdims=True), approx=True)
            heads.append(jnp.dot(p, v_b[:, lo:lo + head_dim],
                                 preferred_element_type=jnp.float32))
        ctx_rows.append(jnp.concatenate(heads, axis=-1))      # [S, H]
    ctx = jnp.concatenate(ctx_rows, axis=0)                   # [M, H]

    attn = jnp.dot(ctx, wo_ref[0], preferred_element_type=jnp.float32) + bo
    x = _layernorm(attn + x, g1, b1, eps)

    # --- feed-forward (exact erf GELU, matches HF BERT) ---
    h_ff = jnp.dot(x, wi_ref[0], preferred_element_type=jnp.float32) + bi
    h_ff = 0.5 * h_ff * (1.0 + lax.erf(h_ff * 0.7071067811865475))
    ffn = jnp.dot(h_ff, wo2_ref[0], preferred_element_type=jnp.float32) + bo2
    x = _layernorm(ffn + x, g2, b2, eps)

    hid_ref[...] = x                              # carry to next grid step

    # --- last layer: fused pooler + classifier (logits only leave the kernel) ---
    @pl.when(l == pl.num_programs(0) - 1)
    def _():
        cls = jnp.concatenate([x[b * seq:b * seq + 1, :] for b in range(batch)],
                              axis=0)                                  # [B, H]
        pooled = jnp.tanh(jnp.dot(cls, pw_ref[...],
                                  preferred_element_type=jnp.float32) + pb_ref[...])
        logits_ref[...] = (jnp.dot(pooled, cw_ref[...],
                                   preferred_element_type=jnp.float32) + cb_ref[...])


def finbert_fused(emb, key_bias, params, batch, seq):
    """emb: [B*S, H], key_bias: [B, S] -> logits [B, NUM_LABELS]."""
    M, H = emb.shape
    L = params["wqkv"].shape[0]
    I = params["wi"].shape[-1]
    PAD = params["vec"].shape[-1]
    N = params["cls_w"].shape[-1]

    def full2(shape):
        return pl.BlockSpec(shape, lambda l: (0, 0))

    def per_layer(shape):
        return pl.BlockSpec((1,) + shape, lambda l: (l, 0, 0))

    kernel = functools.partial(_finbert_kernel, batch=batch, seq=seq,
                               num_heads=NUM_HEADS, head_dim=HEAD_DIM, eps=LN_EPS)

    hidden_states, logits = pl.pallas_call(
        kernel,
        out_shape=(jax.ShapeDtypeStruct((M, H), jnp.float32),     # carry (discarded)
                   jax.ShapeDtypeStruct((batch, N), jnp.float32)),
        grid=(L,),
        in_specs=[
            full2((M, H)),                      # summed embeddings
            full2((batch, seq)),                # additive key-padding bias
            full2((2, H)),                      # embedding LN gamma/beta
            per_layer((H, 3 * H)),              # packed Wqkv (scale folded into Wq)
            per_layer((H, H)),                  # Wo
            per_layer((H, I)),                  # Wi
            per_layer((I, H)),                  # Wo2
            per_layer((8, PAD)),                # packed per-layer bias/LN vectors
            full2((H, H)), full2((1, H)),       # pooler W, b
            full2((H, N)), full2((1, N)),       # classifier W, b
        ],
        out_specs=(full2((M, H)), full2((batch, N))),
        compiler_params=pltpu.CompilerParams(
            dimension_semantics=("arbitrary",)),  # layer loop is sequential
    )(emb, key_bias, params["emb_ln"],
      params["wqkv"], params["wo"], params["wi"], params["wo2"], params["vec"],
      params["pool_w"], params["pool_b"], params["cls_w"], params["cls_b"])
    del hidden_states
    return logits


# ----------------------------------------------------------------------------
# Synthetic FinBERT parameters + forward
# ----------------------------------------------------------------------------

def init_params(key):
    def nrm(k, shape, scale=0.02):
        return scale * jax.random.normal(k, shape, dtype=jnp.float32)

    keys = jax.random.split(key, 6 + NUM_LAYERS)
    inv_sqrt_d = 1.0 / math.sqrt(HEAD_DIM)

    params = {
        "word_emb": nrm(keys[0], (VOCAB, HIDDEN)),
        "pos_emb": nrm(keys[1], (MAX_POS, HIDDEN)),
        "type_emb": nrm(keys[2], (TYPE_VOCAB, HIDDEN)),
        "emb_ln": jnp.concatenate([jnp.ones((1, HIDDEN), jnp.float32),
                                   jnp.zeros((1, HIDDEN), jnp.float32)], axis=0),
        "pool_w": nrm(keys[3], (HIDDEN, HIDDEN)),
        "pool_b": jnp.zeros((1, HIDDEN), jnp.float32),
        "cls_w": nrm(keys[4], (HIDDEN, NUM_LABELS)),
        "cls_b": jnp.zeros((1, NUM_LABELS), jnp.float32),
    }

    wqkv_l, wo_l, wi_l, wo2_l, vec_l = [], [], [], [], []
    for l in range(NUM_LAYERS):
        lk = jax.random.split(keys[6 + l], 6)
        wq = nrm(lk[0], (HIDDEN, HIDDEN)) * inv_sqrt_d   # fold 1/sqrt(Dh) into Wq
        wk = nrm(lk[1], (HIDDEN, HIDDEN))
        wv = nrm(lk[2], (HIDDEN, HIDDEN))
        wqkv_l.append(jnp.concatenate([wq, wk, wv], axis=1))   # packed [H, 3H]
        wo_l.append(nrm(lk[3], (HIDDEN, HIDDEN)))
        wi_l.append(nrm(lk[4], (HIDDEN, INTERMEDIATE)))
        wo2_l.append(nrm(lk[5], (INTERMEDIATE, HIDDEN)))

        bq = jnp.zeros((HIDDEN,), jnp.float32) * inv_sqrt_d    # q bias gets scale too
        bkv = jnp.zeros((2 * HIDDEN,), jnp.float32)
        rows = [
            jnp.concatenate([bq, bkv]),                 # 0: bqkv  [3H]
            jnp.zeros((HIDDEN,), jnp.float32),          # 1: bo
            jnp.ones((HIDDEN,), jnp.float32),           # 2: ln1 gamma
            jnp.zeros((HIDDEN,), jnp.float32),          # 3: ln1 beta
            jnp.zeros((INTERMEDIATE,), jnp.float32),    # 4: bi    [I]
            jnp.zeros((HIDDEN,), jnp.float32),          # 5: bo2
            jnp.ones((HIDDEN,), jnp.float32),           # 6: ln2 gamma
            jnp.zeros((HIDDEN,), jnp.float32),          # 7: ln2 beta
        ]
        slab = jnp.stack([jnp.pad(r, (0, VEC_PAD - r.shape[0])) for r in rows],
                         axis=0)                        # [8, VEC_PAD]
        vec_l.append(slab)

    stk = lambda xs: jnp.stack(xs, axis=0)
    params.update({"wqkv": stk(wqkv_l), "wo": stk(wo_l),
                   "wi": stk(wi_l), "wo2": stk(wo2_l), "vec": stk(vec_l)})
    return params


def finbert_forward(params, input_ids, attention_mask):
    """Mirrors FinBERTWrapper.forward: returns logits [B, NUM_LABELS]."""
    B, S = input_ids.shape
    M = B * S

    # Embedding gathers stay in plain JAX; the LayerNorm is fused into grid
    # step 0 of the Pallas kernel.
    tok = params["word_emb"][input_ids]                      # [B, S, H]
    pos = params["pos_emb"][:S][None, :, :]                  # [1, S, H]
    typ = params["type_emb"][0][None, None, :]               # token_type_ids = 0
    emb = (tok + pos + typ).reshape(M, HIDDEN)

    # Tiny per-batch additive key-padding bias [B, S] (0 keep / -1e9 masked);
    # attention is computed per batch inside the kernel, so no [M,M] bias.
    key_bias = (attention_mask.astype(jnp.float32) - 1.0) * 1e9

    return finbert_fused(emb, key_bias, params, B, S)        # [B, NUM_LABELS]


if __name__ == "__main__":
    key = jax.random.PRNGKey(0)
    k_param, k_ids = jax.random.split(key)

    B, S = 2, 8
    params = init_params(k_param)
    input_ids = jax.random.randint(k_ids, (B, S), 0, VOCAB, dtype=jnp.int32)
    # last two tokens of the second sequence are padding
    attention_mask = jnp.array(
        [[1, 1, 1, 1, 1, 1, 1, 1],
         [1, 1, 1, 1, 1, 1, 0, 0]], dtype=jnp.int32)

    logits = jax.jit(finbert_forward)(params, input_ids, attention_mask)
    jax.block_until_ready(logits)
    assert logits.shape == (B, NUM_LABELS) and logits.dtype == jnp.float32
    assert bool(jnp.all(jnp.isfinite(logits)))
    print("KERNEL_OK")
</pallas_src>

<mosaic_0001>
module attributes {stable_mosaic.version = 11 : i64} {
  func.func @_finbert_kernel(%arg0: i32, %arg1: memref<16x32xf32, #tpu.memory_space<vmem>>, %arg2: memref<2x8xf32, #tpu.memory_space<vmem>>, %arg3: memref<2x32xf32, #tpu.memory_space<vmem>>, %arg4: memref<1x32x96xf32, #tpu.memory_space<vmem>>, %arg5: memref<1x32x32xf32, #tpu.memory_space<vmem>>, %arg6: memref<1x32x128xf32, #tpu.memory_space<vmem>>, %arg7: memref<1x128x32xf32, #tpu.memory_space<vmem>>, %arg8: memref<1x8x128xf32, #tpu.memory_space<vmem>>, %arg9: memref<32x32xf32, #tpu.memory_space<vmem>>, %arg10: memref<1x32xf32, #tpu.memory_space<vmem>>, %arg11: memref<32x3xf32, #tpu.memory_space<vmem>>, %arg12: memref<1x3xf32, #tpu.memory_space<vmem>>, %arg13: memref<16x32xf32, #tpu.memory_space<vmem>>, %arg14: memref<2x3xf32, #tpu.memory_space<vmem>>) attributes {dimension_semantics = [#tpu.dimension_semantics<arbitrary>], iteration_bounds = array<i64: 2>, scalar_prefetch = 0 : i64, scratch_operands = 0 : i64, tpu.core_type = #tpu.core_type<tc>, window_params = [{pipeline_mode = #tpu.pipeline_mode<synchronous>, transform_indices = @transform_0, window_bounds = array<i64: 16, 32>}, {pipeline_mode = #tpu.pipeline_mode<synchronous>, transform_indices = @transform_1, window_bounds = array<i64: 2, 8>}, {pipeline_mode = #tpu.pipeline_mode<synchronous>, transform_indices = @transform_2, window_bounds = array<i64: 2, 32>}, {transform_indices = @transform_3, window_bounds = array<i64: 1, 32, 96>}, {transform_indices = @transform_4, window_bounds = array<i64: 1, 32, 32>}, {transform_indices = @transform_5, window_bounds = array<i64: 1, 32, 128>}, {transform_indices = @transform_6, window_bounds = array<i64: 1, 128, 32>}, {transform_indices = @transform_7, window_bounds = array<i64: 1, 8, 128>}, {pipeline_mode = #tpu.pipeline_mode<synchronous>, transform_indices = @transform_8, window_bounds = array<i64: 32, 32>}, {pipeline_mode = #tpu.pipeline_mode<synchronous>, transform_indices = @transform_9, window_bounds = array<i64: 1, 32>}, {pipeline_mode = #tpu.pipeline_mode<synchronous>, transform_indices = @transform_10, window_bounds = array<i64: 32, 3>}, {pipeline_mode = #tpu.pipeline_mode<synchronous>, transform_indices = @transform_11, window_bounds = array<i64: 1, 3>}, {pipeline_mode = #tpu.pipeline_mode<synchronous>, transform_indices = @transform_12, window_bounds = array<i64: 16, 32>}, {pipeline_mode = #tpu.pipeline_mode<synchronous>, transform_indices = @transform_13, window_bounds = array<i64: 2, 3>}]} {
    %c0_i32 = arith.constant 0 : i32
    %0 = arith.cmpi eq, %arg0, %c0_i32 : i32
    %1 = arith.extui %0 : i1 to i32
    %c0_i32_0 = arith.constant 0 : i32
    %2 = arith.cmpi ne, %1, %c0_i32_0 : i32
    scf.if %2 {
      %c0_71 = arith.constant 0 : index
      %c0_72 = arith.constant 0 : index
      %241 = vector.load %arg1[%c0_71, %c0_72] : memref<16x32xf32, #tpu.memory_space<vmem>>, vector<16x32xf32>
      %c0_73 = arith.constant 0 : index
      %c0_74 = arith.constant 0 : index
      %242 = vector.load %arg3[%c0_73, %c0_74] : memref<2x32xf32, #tpu.memory_space<vmem>>, vector<1x32xf32>
      %c1_75 = arith.constant 1 : index
      %c0_76 = arith.constant 0 : index
      %243 = vector.load %arg3[%c1_75, %c0_76] : memref<2x32xf32, #tpu.memory_space<vmem>>, vector<1x32xf32>
      %cst_77 = arith.constant dense<0.000000e+00> : vector<16xf32>
      %244 = vector.multi_reduction <add>, %241, %cst_77 [1] : vector<16x32xf32> to vector<16xf32>
      %245 = vector.shape_cast %244 : vector<16xf32> to vector<16x1xf32>
      %cst_78 = arith.constant 3.200000e+01 : f32
      %246 = vector.broadcast %cst_78 : f32 to vector<16x1xf32>
      %247 = arith.divf %245, %246 : vector<16x1xf32>
      %248 = vector.broadcast %247 : vector<16x1xf32> to vector<16x32xf32>
      %249 = arith.subf %241, %248 : vector<16x32xf32>
      %250 = arith.mulf %249, %249 : vector<16x32xf32>
      %cst_79 = arith.constant dense<0.000000e+00> : vector<16xf32>
      %251 = vector.multi_reduction <add>, %250, %cst_79 [1] : vector<16x32xf32> to vector<16xf32>
      %252 = vector.shape_cast %251 : vector<16xf32> to vector<16x1xf32>
      %cst_80 = arith.constant 3.200000e+01 : f32
      %253 = vector.broadcast %cst_80 : f32 to vector<16x1xf32>
      %254 = arith.divf %252, %253 : vector<16x1xf32>
      %255 = vector.broadcast %247 : vector<16x1xf32> to vector<16x32xf32>
      %256 = arith.subf %241, %255 : vector<16x32xf32>
      %cst_81 = arith.constant 9.99999996E-13 : f32
      %257 = vector.broadcast %cst_81 : f32 to vector<16x1xf32>
      %258 = arith.addf %254, %257 : vector<16x1xf32>
      %259 = math.rsqrt %258 : vector<16x1xf32>
      %260 = vector.broadcast %259 : vector<16x1xf32> to vector<16x32xf32>
      %261 = arith.mulf %256, %260 : vector<16x32xf32>
      %262 = vector.broadcast %242 : vector<1x32xf32> to vector<16x32xf32>
      %263 = arith.mulf %261, %262 : vector<16x32xf32>
      %264 = vector.broadcast %243 : vector<1x32xf32> to vector<16x32xf32>
      %265 = arith.addf %263, %264 : vector<16x32xf32>
      %c0_82 = arith.constant 0 : index
      %c0_83 = arith.constant 0 : index
      %266 = vector.load %arg13[%c0_82, %c0_83] : memref<16x32xf32, #tpu.memory_space<vmem>>, vector<16x32xf32>
      tpu.vector_store %arg13[%c0_82, %c0_83], %265 {strides = array<i32>} : memref<16x32xf32, #tpu.memory_space<vmem>>, vector<16x32xf32>,
    } else {
    }
    %c0 = arith.constant 0 : index
    %c0_1 = arith.constant 0 : index
    %3 = vector.load %arg13[%c0, %c0_1] : memref<16x32xf32, #tpu.memory_space<vmem>>, vector<16x32xf32>
    %c0_2 = arith.constant 0 : index
    %c0_3 = arith.constant 0 : index
    %c0_4 = arith.constant 0 : index
    %4 = vector.load %arg8[%c0_2, %c0_3, %c0_4] : memref<1x8x128xf32, #tpu.memory_space<vmem>>, vector<1x8x128xf32>
    %5 = vector.shape_cast %4 : vector<1x8x128xf32> to vector<8x128xf32>
    %6 = vector.extract_strided_slice %5 {offsets = [0, 0], sizes = [1, 96], strides = [1, 1]} : vector<8x128xf32> to vector<1x96xf32>
    %7 = vector.extract_strided_slice %5 {offsets = [1, 0], sizes = [1, 32], strides = [1, 1]} : vector<8x128xf32> to vector<1x32xf32>
    %8 = vector.extract_strided_slice %5 {offsets = [2, 0], sizes = [1, 32], strides = [1, 1]} : vector<8x128xf32> to vector<1x32xf32>
    %9 = vector.extract_strided_slice %5 {offsets = [3, 0], sizes = [1, 32], strides = [1, 1]} : vector<8x128xf32> to vector<1x32xf32>
    %10 = vector.extract_strided_slice %5 {offsets = [4, 0], sizes = [1, 128], strides = [1, 1]} : vector<8x128xf32> to vector<1x128xf32>
    %11 = vector.extract_strided_slice %5 {offsets = [5, 0], sizes = [1, 32], strides = [1, 1]} : vector<8x128xf32> to vector<1x32xf32>
    %12 = vector.extract_strided_slice %5 {offsets = [6, 0], sizes = [1, 32], strides = [1, 1]} : vector<8x128xf32> to vector<1x32xf32>
    %13 = vector.extract_strided_slice %5 {offsets = [7, 0], sizes = [1, 32], strides = [1, 1]} : vector<8x128xf32> to vector<1x32xf32>
    %c0_5 = arith.constant 0 : index
    %c0_6 = arith.constant 0 : index
    %c0_7 = arith.constant 0 : index
    %14 = vector.load %arg4[%c0_5, %c0_6, %c0_7] : memref<1x32x96xf32, #tpu.memory_space<vmem>>, vector<1x32x96xf32>
    %15 = vector.shape_cast %14 : vector<1x32x96xf32> to vector<32x96xf32>
    %cst = arith.constant dense<0.000000e+00> : vector<16x96xf32>
    %16 = tpu.matmul %3, %15, %cst {dimension_numbers = #tpu.dot_dimension_numbers<[1], [0], [0], [1], [0, 0, 1, 1], [], []>} : vector<16x32xf32>, vector<32x96xf32>, vector<16x96xf32> -> vector<16x96xf32>
    %17 = vector.broadcast %6 : vector<1x96xf32> to vector<16x96xf32>
    %18 = arith.addf %16, %17 : vector<16x96xf32>
    %19 = vector.extract_strided_slice %18 {offsets = [0, 0], sizes = [8, 32], strides = [1, 1]} : vector<16x96xf32> to vector<8x32xf32>
    %20 = vector.extract_strided_slice %18 {offsets = [0, 32], sizes = [8, 32], strides = [1, 1]} : vector<16x96xf32> to vector<8x32xf32>
    %21 = tpu.transpose %20, [1, 0] : vector<8x32xf32> -> vector<32x8xf32>
    %22 = vector.extract_strided_slice %18 {offsets = [0, 64], sizes = [8, 32], strides = [1, 1]} : vector<16x96xf32> to vector<8x32xf32>
    %c0_8 = arith.constant 0 : index
    %c0_9 = arith.constant 0 : index
    %23 = vector.load %arg2[%c0_8, %c0_9] : memref<2x8xf32, #tpu.memory_space<vmem>>, vector<1x8xf32>
    %24 = vector.extract_strided_slice %19 {offsets = [0, 0], sizes = [8, 8], strides = [1, 1]} : vector<8x32xf32> to vector<8x8xf32>
    %25 = vector.extract_strided_slice %21 {offsets = [0, 0], sizes = [8, 8], strides = [1, 1]} : vector<32x8xf32> to vector<8x8xf32>
    %cst_10 = arith.constant dense<0.000000e+00> : vector<8x8xf32>
    %26 = tpu.matmul %24, %25, %cst_10 {dimension_numbers = #tpu.dot_dimension_numbers<[1], [0], [0], [1], [0, 0, 1, 1], [], []>} : vector<8x8xf32>, vector<8x8xf32>, vector<8x8xf32> -> vector<8x8xf32>
    %27 = vector.broadcast %23 : vector<1x8xf32> to vector<8x8xf32>
    %28 = arith.addf %26, %27 : vector<8x8xf32>
    %cst_11 = arith.constant dense<0xFF800000> : vector<8xf32>
    %29 = vector.multi_reduction <maximumf>, %28, %cst_11 [1] : vector<8x8xf32> to vector<8xf32>
    %30 = vector.shape_cast %29 : vector<8xf32> to vector<8x1xf32>
    %31 = vector.broadcast %30 : vector<8x1xf32> to vector<8x8xf32>
    %32 = arith.subf %28, %31 : vector<8x8xf32>
    %33 = math.exp %32 : vector<8x8xf32>
    %cst_12 = arith.constant dense<0.000000e+00> : vector<8xf32>
    %34 = vector.multi_reduction <add>, %33, %cst_12 [1] : vector<8x8xf32> to vector<8xf32>
    %35 = vector.shape_cast %34 : vector<8xf32> to vector<8x1xf32>
    %36 = tpu.reciprocal %35 {approx = true} : vector<8x1xf32> -> vector<8x1xf32>
    %37 = vector.broadcast %36 : vector<8x1xf32> to vector<8x8xf32>
    %38 = arith.mulf %33, %37 : vector<8x8xf32>
    %39 = vector.extract_strided_slice %22 {offsets = [0, 0], sizes = [8, 8], strides = [1, 1]} : vector<8x32xf32> to vector<8x8xf32>
    %cst_13 = arith.constant dense<0.000000e+00> : vector<8x8xf32>
    %40 = tpu.matmul %38, %39, %cst_13 {dimension_numbers = #tpu.dot_dimension_numbers<[1], [0], [0], [1], [0, 0, 1, 1], [], []>} : vector<8x8xf32>, vector<8x8xf32>, vector<8x8xf32> -> vector<8x8xf32>
    %41 = vector.extract_strided_slice %19 {offsets = [0, 8], sizes = [8, 8], strides = [1, 1]} : vector<8x32xf32> to vector<8x8xf32>
    %42 = vector.extract_strided_slice %21 {offsets = [8, 0], sizes = [8, 8], strides = [1, 1]} : vector<32x8xf32> to vector<8x8xf32>
    %cst_14 = arith.constant dense<0.000000e+00> : vector<8x8xf32>
    %43 = tpu.matmul %41, %42, %cst_14 {dimension_numbers = #tpu.dot_dimension_numbers<[1], [0], [0], [1], [0, 0, 1, 1], [], []>} : vector<8x8xf32>, vector<8x8xf32>, vector<8x8xf32> -> vector<8x8xf32>
    %44 = vector.broadcast %23 : vector<1x8xf32> to vector<8x8xf32>
    %45 = arith.addf %43, %44 : vector<8x8xf32>
    %cst_15 = arith.constant dense<0xFF800000> : vector<8xf32>
    %46 = vector.multi_reduction <maximumf>, %45, %cst_15 [1] : vector<8x8xf32> to vector<8xf32>
    %47 = vector.shape_cast %46 : vector<8xf32> to vector<8x1xf32>
    %48 = vector.broadcast %47 : vector<8x1xf32> to vector<8x8xf32>
    %49 = arith.subf %45, %48 : vector<8x8xf32>
    %50 = math.exp %49 : vector<8x8xf32>
    %cst_16 = arith.constant dense<0.000000e+00> : vector<8xf32>
    %51 = vector.multi_reduction <add>, %50, %cst_16 [1] : vector<8x8xf32> to vector<8xf32>
    %52 = vector.shape_cast %51 : vector<8xf32> to vector<8x1xf32>
    %53 = tpu.reciprocal %52 {approx = true} : vector<8x1xf32> -> vector<8x1xf32>
    %54 = vector.broadcast %53 : vector<8x1xf32> to vector<8x8xf32>
    %55 = arith.mulf %50, %54 : vector<8x8xf32>
    %56 = vector.extract_strided_slice %22 {offsets = [0, 8], sizes = [8, 8], strides = [1, 1]} : vector<8x32xf32> to vector<8x8xf32>
    %cst_17 = arith.constant dense<0.000000e+00> : vector<8x8xf32>
    %57 = tpu.matmul %55, %56, %cst_17 {dimension_numbers = #tpu.dot_dimension_numbers<[1], [0], [0], [1], [0, 0, 1, 1], [], []>} : vector<8x8xf32>, vector<8x8xf32>, vector<8x8xf32> -> vector<8x8xf32>
    %58 = vector.extract_strided_slice %19 {offsets = [0, 16], sizes = [8, 8], strides = [1, 1]} : vector<8x32xf32> to vector<8x8xf32>
    %59 = vector.extract_strided_slice %21 {offsets = [16, 0], sizes = [8, 8], strides = [1, 1]} : vector<32x8xf32> to vector<8x8xf32>
    %cst_18 = arith.constant dense<0.000000e+00> : vector<8x8xf32>
    %60 = tpu.matmul %58, %59, %cst_18 {dimension_numbers = #tpu.dot_dimension_numbers<[1], [0], [0], [1], [0, 0, 1, 1], [], []>} : vector<8x8xf32>, vector<8x8xf32>, vector<8x8xf32> -> vector<8x8xf32>
    %61 = vector.broadcast %23 : vector<1x8xf32> to vector<8x8xf32>
    %62 = arith.addf %60, %61 : vector<8x8xf32>
    %cst_19 = arith.constant dense<0xFF800000> : vector<8xf32>
    %63 = vector.multi_reduction <maximumf>, %62, %cst_19 [1] : vector<8x8xf32> to vector<8xf32>
    %64 = vector.shape_cast %63 : vector<8xf32> to vector<8x1xf32>
    %65 = vector.broadcast %64 : vector<8x1xf32> to vector<8x8xf32>
    %66 = arith.subf %62, %65 : vector<8x8xf32>
    %67 = math.exp %66 : vector<8x8xf32>
    %cst_20 = arith.constant dense<0.000000e+00> : vector<8xf32>
    %68 = vector.multi_reduction <add>, %67, %cst_20 [1] : vector<8x8xf32> to vector<8xf32>
    %69 = vector.shape_cast %68 : vector<8xf32> to vector<8x1xf32>
    %70 = tpu.reciprocal %69 {approx = true} : vector<8x1xf32> -> vector<8x1xf32>
    %71 = vector.broadcast %70 : vector<8x1xf32> to vector<8x8xf32>
    %72 = arith.mulf %67, %71 : vector<8x8xf32>
    %73 = vector.extract_strided_slice %22 {offsets = [0, 16], sizes = [8, 8], strides = [1, 1]} : vector<8x32xf32> to vector<8x8xf32>
    %cst_21 = arith.constant dense<0.000000e+00> : vector<8x8xf32>
    %74 = tpu.matmul %72, %73, %cst_21 {dimension_numbers = #tpu.dot_dimension_numbers<[1], [0], [0], [1], [0, 0, 1, 1], [], []>} : vector<8x8xf32>, vector<8x8xf32>, vector<8x8xf32> -> vector<8x8xf32>
    %75 = vector.extract_strided_slice %19 {offsets = [0, 24], sizes = [8, 8], strides = [1, 1]} : vector<8x32xf32> to vector<8x8xf32>
    %76 = vector.extract_strided_slice %21 {offsets = [24, 0], sizes = [8, 8], strides = [1, 1]} : vector<32x8xf32> to vector<8x8xf32>
    %cst_22 = arith.constant dense<0.000000e+00> : vector<8x8xf32>
    %77 = tpu.matmul %75, %76, %cst_22 {dimension_numbers = #tpu.dot_dimension_numbers<[1], [0], [0], [1], [0, 0, 1, 1], [], []>} : vector<8x8xf32>, vector<8x8xf32>, vector<8x8xf32> -> vector<8x8xf32>
    %78 = vector.broadcast %23 : vector<1x8xf32> to vector<8x8xf32>
    %79 = arith.addf %77, %78 : vector<8x8xf32>
    %cst_23 = arith.constant dense<0xFF800000> : vector<8xf32>
    %80 = vector.multi_reduction <maximumf>, %79, %cst_23 [1] : vector<8x8xf32> to vector<8xf32>
    %81 = vector.shape_cast %80 : vector<8xf32> to vector<8x1xf32>
    %82 = vector.broadcast %81 : vector<8x1xf32> to vector<8x8xf32>
    %83 = arith.subf %79, %82 : vector<8x8xf32>
    %84 = math.exp %83 : vector<8x8xf32>
    %cst_24 = arith.constant dense<0.000000e+00> : vector<8xf32>
    %85 = vector.multi_reduction <add>, %84, %cst_24 [1] : vector<8x8xf32> to vector<8xf32>
    %86 = vector.shape_cast %85 : vector<8xf32> to vector<8x1xf32>
    %87 = tpu.reciprocal %86 {approx = true} : vector<8x1xf32> -> vector<8x1xf32>
    %88 = vector.broadcast %87 : vector<8x1xf32> to vector<8x8xf32>
    %89 = arith.mulf %84, %88 : vector<8x8xf32>
    %90 = vector.extract_strided_slice %22 {offsets = [0, 24], sizes = [8, 8], strides = [1, 1]} : vector<8x32xf32> to vector<8x8xf32>
    %cst_25 = arith.constant dense<0.000000e+00> : vector<8x8xf32>
    %91 = tpu.matmul %89, %90, %cst_25 {dimension_numbers = #tpu.dot_dimension_numbers<[1], [0], [0], [1], [0, 0, 1, 1], [], []>} : vector<8x8xf32>, vector<8x8xf32>, vector<8x8xf32> -> vector<8x8xf32>
    %92 = tpu.concatenate %40, %57, %74, %91 in 1 : vector<8x8xf32>, vector<8x8xf32>, vector<8x8xf32>, vector<8x8xf32> -> vector<8x32xf32>
    %93 = vector.extract_strided_slice %18 {offsets = [8, 0], sizes = [8, 32], strides = [1, 1]} : vector<16x96xf32> to vector<8x32xf32>
    %94 = vector.extract_strided_slice %18 {offsets = [8, 32], sizes = [8, 32], strides = [1, 1]} : vector<16x96xf32> to vector<8x32xf32>
    %95 = tpu.transpose %94, [1, 0] : vector<8x32xf32> -> vector<32x8xf32>
    %96 = vector.extract_strided_slice %18 {offsets = [8, 64], sizes = [8, 32], strides = [1, 1]} : vector<16x96xf32> to vector<8x32xf32>
    %c1 = arith.constant 1 : index
    %c0_26 = arith.constant 0 : index
    %97 = vector.load %arg2[%c1, %c0_26] : memref<2x8xf32, #tpu.memory_space<vmem>>, vector<1x8xf32>
    %98 = vector.extract_strided_slice %93 {offsets = [0, 0], sizes = [8, 8], strides = [1, 1]} : vector<8x32xf32> to vector<8x8xf32>
    %99 = vector.extract_strided_slice %95 {offsets = [0, 0], sizes = [8, 8], strides = [1, 1]} : vector<32x8xf32> to vector<8x8xf32>
    %cst_27 = arith.constant dense<0.000000e+00> : vector<8x8xf32>
    %100 = tpu.matmul %98, %99, %cst_27 {dimension_numbers = #tpu.dot_dimension_numbers<[1], [0], [0], [1], [0, 0, 1, 1], [], []>} : vector<8x8xf32>, vector<8x8xf32>, vector<8x8xf32> -> vector<8x8xf32>
    %101 = vector.broadcast %97 : vector<1x8xf32> to vector<8x8xf32>
    %102 = arith.addf %100, %101 : vector<8x8xf32>
    %cst_28 = arith.constant dense<0xFF800000> : vector<8xf32>
    %103 = vector.multi_reduction <maximumf>, %102, %cst_28 [1] : vector<8x8xf32> to vector<8xf32>
    %104 = vector.shape_cast %103 : vector<8xf32> to vector<8x1xf32>
    %105 = vector.broadcast %104 : vector<8x1xf32> to vector<8x8xf32>
    %106 = arith.subf %102, %105 : vector<8x8xf32>
    %107 = math.exp %106 : vector<8x8xf32>
    %cst_29 = arith.constant dense<0.000000e+00> : vector<8xf32>
    %108 = vector.multi_reduction <add>, %107, %cst_29 [1] : vector<8x8xf32> to vector<8xf32>
    %109 = vector.shape_cast %108 : vector<8xf32> to vector<8x1xf32>
    %110 = tpu.reciprocal %109 {approx = true} : vector<8x1xf32> -> vector<8x1xf32>
    %111 = vector.broadcast %110 : vector<8x1xf32> to vector<8x8xf32>
    %112 = arith.mulf %107, %111 : vector<8x8xf32>
    %113 = vector.extract_strided_slice %96 {offsets = [0, 0], sizes = [8, 8], strides = [1, 1]} : vector<8x32xf32> to vector<8x8xf32>
    %cst_30 = arith.constant dense<0.000000e+00> : vector<8x8xf32>
    %114 = tpu.matmul %112, %113, %cst_30 {dimension_numbers = #tpu.dot_dimension_numbers<[1], [0], [0], [1], [0, 0, 1, 1], [], []>} : vector<8x8xf32>, vector<8x8xf32>, vector<8x8xf32> -> vector<8x8xf32>
    %115 = vector.extract_strided_slice %93 {offsets = [0, 8], sizes = [8, 8], strides = [1, 1]} : vector<8x32xf32> to vector<8x8xf32>
    %116 = vector.extract_strided_slice %95 {offsets = [8, 0], sizes = [8, 8], strides = [1, 1]} : vector<32x8xf32> to vector<8x8xf32>
    %cst_31 = arith.constant dense<0.000000e+00> : vector<8x8xf32>
    %117 = tpu.matmul %115, %116, %cst_31 {dimension_numbers = #tpu.dot_dimension_numbers<[1], [0], [0], [1], [0, 0, 1, 1], [], []>} : vector<8x8xf32>, vector<8x8xf32>, vector<8x8xf32> -> vector<8x8xf32>
    %118 = vector.broadcast %97 : vector<1x8xf32> to vector<8x8xf32>
    %119 = arith.addf %117, %118 : vector<8x8xf32>
    %cst_32 = arith.constant dense<0xFF800000> : vector<8xf32>
    %120 = vector.multi_reduction <maximumf>, %119, %cst_32 [1] : vector<8x8xf32> to vector<8xf32>
    %121 = vector.shape_cast %120 : vector<8xf32> to vector<8x1xf32>
    %122 = vector.broadcast %121 : vector<8x1xf32> to vector<8x8xf32>
    %123 = arith.subf %119, %122 : vector<8x8xf32>
    %124 = math.exp %123 : vector<8x8xf32>
    %cst_33 = arith.constant dense<0.000000e+00> : vector<8xf32>
    %125 = vector.multi_reduction <add>, %124, %cst_33 [1] : vector<8x8xf32> to vector<8xf32>
    %126 = vector.shape_cast %125 : vector<8xf32> to vector<8x1xf32>
    %127 = tpu.reciprocal %126 {approx = true} : vector<8x1xf32> -> vector<8x1xf32>
    %128 = vector.broadcast %127 : vector<8x1xf32> to vector<8x8xf32>
    %129 = arith.mulf %124, %128 : vector<8x8xf32>
    %130 = vector.extract_strided_slice %96 {offsets = [0, 8], sizes = [8, 8], strides = [1, 1]} : vector<8x32xf32> to vector<8x8xf32>
    %cst_34 = arith.constant dense<0.000000e+00> : vector<8x8xf32>
    %131 = tpu.matmul %129, %130, %cst_34 {dimension_numbers = #tpu.dot_dimension_numbers<[1], [0], [0], [1], [0, 0, 1, 1], [], []>} : vector<8x8xf32>, vector<8x8xf32>, vector<8x8xf32> -> vector<8x8xf32>
    %132 = vector.extract_strided_slice %93 {offsets = [0, 16], sizes = [8, 8], strides = [1, 1]} : vector<8x32xf32> to vector<8x8xf32>
    %133 = vector.extract_strided_slice %95 {offsets = [16, 0], sizes = [8, 8], strides = [1, 1]} : vector<32x8xf32> to vector<8x8xf32>
    %cst_35 = arith.constant dense<0.000000e+00> : vector<8x8xf32>
    %134 = tpu.matmul %132, %133, %cst_35 {dimension_numbers = #tpu.dot_dimension_numbers<[1], [0], [0], [1], [0, 0, 1, 1], [], []>} : vector<8x8xf32>, vector<8x8xf32>, vector<8x8xf32> -> vector<8x8xf32>
    %135 = vector.broadcast %97 : vector<1x8xf32> to vector<8x8xf32>
    %136 = arith.addf %134, %135 : vector<8x8xf32>
    %cst_36 = arith.constant dense<0xFF800000> : vector<8xf32>
    %137 = vector.multi_reduction <maximumf>, %136, %cst_36 [1] : vector<8x8xf32> to vector<8xf32>
    %138 = vector.shape_cast %137 : vector<8xf32> to vector<8x1xf32>
    %139 = vector.broadcast %138 : vector<8x1xf32> to vector<8x8xf32>
    %140 = arith.subf %136, %139 : vector<8x8xf32>
    %141 = math.exp %140 : vector<8x8xf32>
    %cst_37 = arith.constant dense<0.000000e+00> : vector<8xf32>
    %142 = vector.multi_reduction <add>, %141, %cst_37 [1] : vector<8x8xf32> to vector<8xf32>
    %143 = vector.shape_cast %142 : vector<8xf32> to vector<8x1xf32>
    %144 = tpu.reciprocal %143 {approx = true} : vector<8x1xf32> -> vector<8x1xf32>
    %145 = vector.broadcast %144 : vector<8x1xf32> to vector<8x8xf32>
    %146 = arith.mulf %141, %145 : vector<8x8xf32>
    %147 = vector.extract_strided_slice %96 {offsets = [0, 16], sizes = [8, 8], strides = [1, 1]} : vector<8x32xf32> to vector<8x8xf32>
    %cst_38 = arith.constant dense<0.000000e+00> : vector<8x8xf32>
    %148 = tpu.matmul %146, %147, %cst_38 {dimension_numbers = #tpu.dot_dimension_numbers<[1], [0], [0], [1], [0, 0, 1, 1], [], []>} : vector<8x8xf32>, vector<8x8xf32>, vector<8x8xf32> -> vector<8x8xf32>
    %149 = vector.extract_strided_slice %93 {offsets = [0, 24], sizes = [8, 8], strides = [1, 1]} : vector<8x32xf32> to vector<8x8xf32>
    %150 = vector.extract_strided_slice %95 {offsets = [24, 0], sizes = [8, 8], strides = [1, 1]} : vector<32x8xf32> to vector<8x8xf32>
    %cst_39 = arith.constant dense<0.000000e+00> : vector<8x8xf32>
    %151 = tpu.matmul %149, %150, %cst_39 {dimension_numbers = #tpu.dot_dimension_numbers<[1], [0], [0], [1], [0, 0, 1, 1], [], []>} : vector<8x8xf32>, vector<8x8xf32>, vector<8x8xf32> -> vector<8x8xf32>
    %152 = vector.broadcast %97 : vector<1x8xf32> to vector<8x8xf32>
    %153 = arith.addf %151, %152 : vector<8x8xf32>
    %cst_40 = arith.constant dense<0xFF800000> : vector<8xf32>
    %154 = vector.multi_reduction <maximumf>, %153, %cst_40 [1] : vector<8x8xf32> to vector<8xf32>
    %155 = vector.shape_cast %154 : vector<8xf32> to vector<8x1xf32>
    %156 = vector.broadcast %155 : vector<8x1xf32> to vector<8x8xf32>
    %157 = arith.subf %153, %156 : vector<8x8xf32>
    %158 = math.exp %157 : vector<8x8xf32>
    %cst_41 = arith.constant dense<0.000000e+00> : vector<8xf32>
    %159 = vector.multi_reduction <add>, %158, %cst_41 [1] : vector<8x8xf32> to vector<8xf32>
    %160 = vector.shape_cast %159 : vector<8xf32> to vector<8x1xf32>
    %161 = tpu.reciprocal %160 {approx = true} : vector<8x1xf32> -> vector<8x1xf32>
    %162 = vector.broadcast %161 : vector<8x1xf32> to vector<8x8xf32>
    %163 = arith.mulf %158, %162 : vector<8x8xf32>
    %164 = vector.extract_strided_slice %96 {offsets = [0, 24], sizes = [8, 8], strides = [1, 1]} : vector<8x32xf32> to vector<8x8xf32>
    %cst_42 = arith.constant dense<0.000000e+00> : vector<8x8xf32>
    %165 = tpu.matmul %163, %164, %cst_42 {dimension_numbers = #tpu.dot_dimension_numbers<[1], [0], [0], [1], [0, 0, 1, 1], [], []>} : vector<8x8xf32>, vector<8x8xf32>, vector<8x8xf32> -> vector<8x8xf32>
    %166 = tpu.concatenate %114, %131, %148, %165 in 1 : vector<8x8xf32>, vector<8x8xf32>, vector<8x8xf32>, vector<8x8xf32> -> vector<8x32xf32>
    %167 = tpu.concatenate %92, %166 in 0 : vector<8x32xf32>, vector<8x32xf32> -> vector<16x32xf32>
    %c0_43 = arith.constant 0 : index
    %c0_44 = arith.constant 0 : index
    %c0_45 = arith.constant 0 : index
    %168 = vector.load %arg5[%c0_43, %c0_44, %c0_45] : memref<1x32x32xf32, #tpu.memory_space<vmem>>, vector<1x32x32xf32>
    %169 = vector.shape_cast %168 : vector<1x32x32xf32> to vector<32x32xf32>
    %cst_46 = arith.constant dense<0.000000e+00> : vector<16x32xf32>
    %170 = tpu.matmul %167, %169, %cst_46 {dimension_numbers = #tpu.dot_dimension_numbers<[1], [0], [0], [1], [0, 0, 1, 1], [], []>} : vector<16x32xf32>, vector<32x32xf32>, vector<16x32xf32> -> vector<16x32xf32>
    %171 = vector.broadcast %7 : vector<1x32xf32> to vector<16x32xf32>
    %172 = arith.addf %170, %171 : vector<16x32xf32>
    %173 = arith.addf %172, %3 : vector<16x32xf32>
    %cst_47 = arith.constant dense<0.000000e+00> : vector<16xf32>
    %174 = vector.multi_reduction <add>, %173, %cst_47 [1] : vector<16x32xf32> to vector<16xf32>
    %175 = vector.shape_cast %174 : vector<16xf32> to vector<16x1xf32>
    %cst_48 = arith.constant 3.200000e+01 : f32
    %176 = vector.broadcast %cst_48 : f32 to vector<16x1xf32>
    %177 = arith.divf %175, %176 : vector<16x1xf32>
    %178 = vector.broadcast %177 : vector<16x1xf32> to vector<16x32xf32>
    %179 = arith.subf %173, %178 : vector<16x32xf32>
    %180 = arith.mulf %179, %179 : vector<16x32xf32>
    %cst_49 = arith.constant dense<0.000000e+00> : vector<16xf32>
    %181 = vector.multi_reduction <add>, %180, %cst_49 [1] : vector<16x32xf32> to vector<16xf32>
    %182 = vector.shape_cast %181 : vector<16xf32> to vector<16x1xf32>
    %cst_50 = arith.constant 3.200000e+01 : f32
    %183 = vector.broadcast %cst_50 : f32 to vector<16x1xf32>
    %184 = arith.divf %182, %183 : vector<16x1xf32>
    %185 = vector.broadcast %177 : vector<16x1xf32> to vector<16x32xf32>
    %186 = arith.subf %173, %185 : vector<16x32xf32>
    %cst_51 = arith.constant 9.99999996E-13 : f32
    %187 = vector.broadcast %cst_51 : f32 to vector<16x1xf32>
    %188 = arith.addf %184, %187 : vector<16x1xf32>
    %189 = math.rsqrt %188 : vector<16x1xf32>
    %190 = vector.broadcast %189 : vector<16x1xf32> to vector<16x32xf32>
    %191 = arith.mulf %186, %190 : vector<16x32xf32>
    %192 = vector.broadcast %8 : vector<1x32xf32> to vector<16x32xf32>
    %193 = arith.mulf %191, %192 : vector<16x32xf32>
    %194 = vector.broadcast %9 : vector<1x32xf32> to vector<16x32xf32>
    %195 = arith.addf %193, %194 : vector<16x32xf32>
    %c0_52 = arith.constant 0 : index
    %c0_53 = arith.constant 0 : index
    %c0_54 = arith.constant 0 : index
    %196 = vector.load %arg6[%c0_52, %c0_53, %c0_54] : memref<1x32x128xf32, #tpu.memory_space<vmem>>, vector<1x32x128xf32>
    %197 = vector.shape_cast %196 : vector<1x32x128xf32> to vector<32x128xf32>
    %cst_55 = arith.constant dense<0.000000e+00> : vector<16x128xf32>
    %198 = tpu.matmul %195, %197, %cst_55 {dimension_numbers = #tpu.dot_dimension_numbers<[1], [0], [0], [1], [0, 0, 1, 1], [], []>} : vector<16x32xf32>, vector<32x128xf32>, vector<16x128xf32> -> vector<16x128xf32>
    %199 = vector.broadcast %10 : vector<1x128xf32> to vector<16x128xf32>
    %200 = arith.addf %198, %199 : vector<16x128xf32>
    %cst_56 = arith.constant 5.000000e-01 : f32
    %201 = vector.broadcast %cst_56 : f32 to vector<16x128xf32>
    %202 = arith.mulf %201, %200 : vector<16x128xf32>
    %cst_57 = arith.constant 0.707106769 : f32
    %203 = vector.broadcast %cst_57 : f32 to vector<16x128xf32>
    %204 = arith.mulf %200, %203 : vector<16x128xf32>
    %205 = math.erf %204 : vector<16x128xf32>
    %cst_58 = arith.constant 1.000000e+00 : f32
    %206 = vector.broadcast %cst_58 : f32 to vector<16x128xf32>
    %207 = arith.addf %206, %205 : vector<16x128xf32>
    %208 = arith.mulf %202, %207 : vector<16x128xf32>
    %c0_59 = arith.constant 0 : index
    %c0_60 = arith.constant 0 : index
    %c0_61 = arith.constant 0 : index
    %209 = vector.load %arg7[%c0_59, %c0_60, %c0_61] : memref<1x128x32xf32, #tpu.memory_space<vmem>>, vector<1x128x32xf32>
    %210 = vector.shape_cast %209 : vector<1x128x32xf32> to vector<128x32xf32>
    %cst_62 = arith.constant dense<0.000000e+00> : vector<16x32xf32>
    %211 = tpu.matmul %208, %210, %cst_62 {dimension_numbers = #tpu.dot_dimension_numbers<[1], [0], [0], [1], [0, 0, 1, 1], [], []>} : vector<16x128xf32>, vector<128x32xf32>, vector<16x32xf32> -> vector<16x32xf32>
    %212 = vector.broadcast %11 : vector<1x32xf32> to vector<16x32xf32>
    %213 = arith.addf %211, %212 : vector<16x32xf32>
    %214 = arith.addf %213, %195 : vector<16x32xf32>
    %cst_63 = arith.constant dense<0.000000e+00> : vector<16xf32>
    %215 = vector.multi_reduction <add>, %214, %cst_63 [1] : vector<16x32xf32> to vector<16xf32>
    %216 = vector.shape_cast %215 : vector<16xf32> to vector<16x1xf32>
    %cst_64 = arith.constant 3.200000e+01 : f32
    %217 = vector.broadcast %cst_64 : f32 to vector<16x1xf32>
    %218 = arith.divf %216, %217 : vector<16x1xf32>
    %219 = vector.broadcast %218 : vector<16x1xf32> to vector<16x32xf32>
    %220 = arith.subf %214, %219 : vector<16x32xf32>
    %221 = arith.mulf %220, %220 : vector<16x32xf32>
    %cst_65 = arith.constant dense<0.000000e+00> : vector<16xf32>
    %222 = vector.multi_reduction <add>, %221, %cst_65 [1] : vector<16x32xf32> to vector<16xf32>
    %223 = vector.shape_cast %222 : vector<16xf32> to vector<16x1xf32>
    %cst_66 = arith.constant 3.200000e+01 : f32
    %224 = vector.broadcast %cst_66 : f32 to vector<16x1xf32>
    %225 = arith.divf %223, %224 : vector<16x1xf32>
    %226 = vector.broadcast %218 : vector<16x1xf32> to vector<16x32xf32>
    %227 = arith.subf %214, %226 : vector<16x32xf32>
    %cst_67 = arith.constant 9.99999996E-13 : f32
    %228 = vector.broadcast %cst_67 : f32 to vector<16x1xf32>
    %229 = arith.addf %225, %228 : vector<16x1xf32>
    %230 = math.rsqrt %229 : vector<16x1xf32>
    %231 = vector.broadcast %230 : vector<16x1xf32> to vector<16x32xf32>
    %232 = arith.mulf %227, %231 : vector<16x32xf32>
    %233 = vector.broadcast %12 : vector<1x32xf32> to vector<16x32xf32>
    %234 = arith.mulf %232, %233 : vector<16x32xf32>
    %235 = vector.broadcast %13 : vector<1x32xf32> to vector<16x32xf32>
    %236 = arith.addf %234, %235 : vector<16x32xf32>
    %c0_68 = arith.constant 0 : index
    %c0_69 = arith.constant 0 : index
    %237 = vector.load %arg13[%c0_68, %c0_69] : memref<16x32xf32, #tpu.memory_space<vmem>>, vector<16x32xf32>
    tpu.vector_store %arg13[%c0_68, %c0_69], %236 {strides = array<i32>} : memref<16x32xf32, #tpu.memory_space<vmem>>, vector<16x32xf32>,
    %c1_i32 = arith.constant 1 : i32
    %238 = arith.cmpi eq, %arg0, %c1_i32 : i32
    %239 = arith.extui %238 : i1 to i32
    %c0_i32_70 = arith.constant 0 : i32
    %240 = arith.cmpi ne, %239, %c0_i32_70 : i32
    scf.if %240 {
      %241 = vector.extract_strided_slice %236 {offsets = [0, 0], sizes = [1, 32], strides = [1, 1]} : vector<16x32xf32> to vector<1x32xf32>
      %242 = vector.extract_strided_slice %236 {offsets = [8, 0], sizes = [1, 32], strides = [1, 1]} : vector<16x32xf32> to vector<1x32xf32>
      %243 = tpu.concatenate %241, %242 in 0 : vector<1x32xf32>, vector<1x32xf32> -> vector<2x32xf32>
      %c0_71 = arith.constant 0 : index
      %c0_72 = arith.constant 0 : index
      %244 = vector.load %arg9[%c0_71, %c0_72] : memref<32x32xf32, #tpu.memory_space<vmem>>, vector<32x32xf32>
      %cst_73 = arith.constant dense<0.000000e+00> : vector<2x32xf32>
      %245 = tpu.matmul %243, %244, %cst_73 {dimension_numbers = #tpu.dot_dimension_numbers<[1], [0], [0], [1], [0, 0, 1, 1], [], []>} : vector<2x32xf32>, vector<32x32xf32>, vector<2x32xf32> -> vector<2x32xf32>
      %c0_74 = arith.constant 0 : index
      %c0_75 = arith.constant 0 : index
      %246 = vector.load %arg10[%c0_74, %c0_75] : memref<1x32xf32, #tpu.memory_space<vmem>>, vector<1x32xf32>
      %247 = vector.broadcast %246 : vector<1x32xf32> to vector<2x32xf32>
      %248 = arith.addf %245, %247 : vector<2x32xf32>
      %249 = math.tanh %248 : vector<2x32xf32>
      %c0_76 = arith.constant 0 : index
      %c0_77 = arith.constant 0 : index
      %250 = vector.load %arg11[%c0_76, %c0_77] : memref<32x3xf32, #tpu.memory_space<vmem>>, vector<32x3xf32>
      %cst_78 = arith.constant dense<0.000000e+00> : vector<2x3xf32>
      %251 = tpu.matmul %249, %250, %cst_78 {dimension_numbers = #tpu.dot_dimension_numbers<[1], [0], [0], [1], [0, 0, 1, 1], [], []>} : vector<2x32xf32>, vector<32x3xf32>, vector<2x3xf32> -> vector<2x3xf32>
      %c0_79 = arith.constant 0 : index
      %c0_80 = arith.constant 0 : index
      %252 = vector.load %arg12[%c0_79, %c0_80] : memref<1x3xf32, #tpu.memory_space<vmem>>, vector<1x3xf32>
      %253 = vector.broadcast %252 : vector<1x3xf32> to vector<2x3xf32>
      %254 = arith.addf %251, %253 : vector<2x3xf32>
      %c0_81 = arith.constant 0 : index
      %c0_82 = arith.constant 0 : index
      %255 = vector.load %arg14[%c0_81, %c0_82] : memref<2x3xf32, #tpu.memory_space<vmem>>, vector<2x3xf32>
      tpu.vector_store %arg14[%c0_81, %c0_82], %254 {strides = array<i32>} : memref<2x3xf32, #tpu.memory_space<vmem>>, vector<2x3xf32>,
    } else {
    }
    return
  }
  func.func @transform_0(%arg0: i32) -> (i32, i32) {
    %c0_i32 = arith.constant 0 : i32
    %c0_i32_0 = arith.constant 0 : i32
    %c0_i32_1 = arith.constant 0 : i32
    return %c0_i32, %c0_i32_0 : i32, i32
  }
  func.func @transform_1(%arg0: i32) -> (i32, i32) {
    %c0_i32 = arith.constant 0 : i32
    %c0_i32_0 = arith.constant 0 : i32
    %c0_i32_1 = arith.constant 0 : i32
    return %c0_i32, %c0_i32_0 : i32, i32
  }
  func.func @transform_2(%arg0: i32) -> (i32, i32) {
    %c0_i32 = arith.constant 0 : i32
    %c0_i32_0 = arith.constant 0 : i32
    %c0_i32_1 = arith.constant 0 : i32
    return %c0_i32, %c0_i32_0 : i32, i32
  }
  func.func @transform_3(%arg0: i32) -> (i32, i32, i32) {
    %c0_i32 = arith.constant 0 : i32
    %c0_i32_0 = arith.constant 0 : i32
    %c0_i32_1 = arith.constant 0 : i32
    return %arg0, %c0_i32, %c0_i32_0 : i32, i32, i32
  }
  func.func @transform_4(%arg0: i32) -> (i32, i32, i32) {
    %c0_i32 = arith.constant 0 : i32
    %c0_i32_0 = arith.constant 0 : i32
    %c0_i32_1 = arith.constant 0 : i32
    return %arg0, %c0_i32, %c0_i32_0 : i32, i32, i32
  }
  func.func @transform_5(%arg0: i32) -> (i32, i32, i32) {
    %c0_i32 = arith.constant 0 : i32
    %c0_i32_0 = arith.constant 0 : i32
    %c0_i32_1 = arith.constant 0 : i32
    return %arg0, %c0_i32, %c0_i32_0 : i32, i32, i32
  }
  func.func @transform_6(%arg0: i32) -> (i32, i32, i32) {
    %c0_i32 = arith.constant 0 : i32
    %c0_i32_0 = arith.constant 0 : i32
    %c0_i32_1 = arith.constant 0 : i32
    return %arg0, %c0_i32, %c0_i32_0 : i32, i32, i32
  }
  func.func @transform_7(%arg0: i32) -> (i32, i32, i32) {
    %c0_i32 = arith.constant 0 : i32
    %c0_i32_0 = arith.constant 0 : i32
    %c0_i32_1 = arith.constant 0 : i32
    return %arg0, %c0_i32, %c0_i32_0 : i32, i32, i32
  }
  func.func @transform_8(%arg0: i32) -> (i32, i32) {
    %c0_i32 = arith.constant 0 : i32
    %c0_i32_0 = arith.constant 0 : i32
    %c0_i32_1 = arith.constant 0 : i32
    return %c0_i32, %c0_i32_0 : i32, i32
  }
  func.func @transform_9(%arg0: i32) -> (i32, i32) {
    %c0_i32 = arith.constant 0 : i32
    %c0_i32_0 = arith.constant 0 : i32
    %c0_i32_1 = arith.constant 0 : i32
    return %c0_i32, %c0_i32_0 : i32, i32
  }
  func.func @transform_10(%arg0: i32) -> (i32, i32) {
    %c0_i32 = arith.constant 0 : i32
    %c0_i32_0 = arith.constant 0 : i32
    %c0_i32_1 = arith.constant 0 : i32
    return %c0_i32, %c0_i32_0 : i32, i32
  }
  func.func @transform_11(%arg0: i32) -> (i32, i32) {
    %c0_i32 = arith.constant 0 : i32
    %c0_i32_0 = arith.constant 0 : i32
    %c0_i32_1 = arith.constant 0 : i32
    return %c0_i32, %c0_i32_0 : i32, i32
  }
  func.func @transform_12(%arg0: i32) -> (i32, i32) {
    %c0_i32 = arith.constant 0 : i32
    %c0_i32_0 = arith.constant 0 : i32
    %c0_i32_1 = arith.constant 0 : i32
    return %c0_i32, %c0_i32_0 : i32, i32
  }
  func.func @transform_13(%arg0: i32) -> (i32, i32) {
    %c0_i32 = arith.constant 0 : i32
    %c0_i32_0 = arith.constant 0 : i32
    %c0_i32_1 = arith.constant 0 : i32
    return %c0_i32, %c0_i32_0 : i32, i32
  }
}

</mosaic_0001>

<llo_original>
// kernel: finbert_forward.1
$region0: #{finbert_forward.1}
  #allocation0 [shape = 'u32[]', space=smem, size = 0x4, offset = 0x4, fixed_abs, tag = 'smem constant byte address 0x4 - core index']
  #allocation1 [shape = 'u32[72,128]{1,0:T(1,128)}', space=vmem, size = 0x9000, scoped, tag = 'internal scratch']
  %s0 = inlined_call_operand.vmem [shape: f32[16,32], index: 0, kind: input, shape index: {}]
  %s1 = inlined_call_operand.vmem [shape: f32[2,8], index: 1, kind: input, shape index: {}]
  %s2 = inlined_call_operand.vmem [shape: f32[2,32], index: 2, kind: input, shape index: {}]
  %s3 = inlined_call_operand.vmem [shape: f32[2,32,96], index: 3, kind: input, shape index: {}]
  %s4 = inlined_call_operand.vmem [shape: f32[2,32,32], index: 4, kind: input, shape index: {}]
  %s5 = inlined_call_operand.vmem [shape: f32[2,32,128], index: 5, kind: input, shape index: {}]
  %s6 = inlined_call_operand.vmem [shape: f32[2,128,32], index: 6, kind: input, shape index: {}]
  %s7 = inlined_call_operand.vmem [shape: f32[2,8,128], index: 7, kind: input, shape index: {}]
  %s8 = inlined_call_operand.vmem [shape: f32[32,32], index: 8, kind: input, shape index: {}]
  %s9 = inlined_call_operand.vmem [shape: f32[1,32], index: 9, kind: input, shape index: {}]
  %s10 = inlined_call_operand.vmem [shape: f32[32,3], index: 10, kind: input, shape index: {}]
  %s11 = inlined_call_operand.vmem [shape: f32[1,3], index: 11, kind: input, shape index: {}]
  %s12 = inlined_call_operand.hbm [shape: f32[16,32], index: 12, kind: output, shape index: {0}]
  %s13 = inlined_call_operand.hbm [shape: f32[2,3], index: 13, kind: output, shape index: {1}]
  %14 = xla_tuple %s12, %s13
  %s15 = sld [smem:[#allocation0]]
  $region97: #{finbert_forward.1} parent=0
    _
  %s17 = ssub.s32 1, %s15
  %s18 = scalar_select 0, %s17, %s15
  $region1: #{finbert_forward.1} parent=0
    #allocation2 [shape = 'u8[8192]{0}', space=vmem, size = 0x2000, scoped, tag = 'output window, operand 0, single buffered']
    #allocation3 [shape = 's32[2]{0}', space=sflag, size = 0x8, scoped, tag = 'scoped memory for finbert_forward.1']
    #allocation4 [shape = 'u8[1024]{0}', space=vmem, size = 0x400, scoped, tag = 'output window, operand 1, single buffered']
    #allocation5 [shape = 's32[1]{0}', space=sflag, size = 0x4, scoped, tag = 'scoped memory for finbert_forward.1']
    %19 = vsyncpa [#allocation3], 0
    %20 = vsyncpa [#allocation5], 0
    loop: start=0, step=1, limit=4
    $region2: #{finbert_forward.1} parent=1 // loop_pre_header
      _
    $region3: #{finbert_forward.1} parent=1 // loop_header
      %s22 = sphi 0, %s26
      %p23 = scmp.ge.s32.totalorder %s22, 4
      %s30 = sphi 0, %s30
      %s32 = sphi 0, %s30
      %s33 = sphi 0, %s32
      %s47 = sphi 0, %s33
      %s51 = sphi 0, %s51
      %s53 = sphi 0, %s51
      %s54 = sphi 0, %s53
      %s68 = sphi 0, %s54
      %s72 = sphi 0, %s72
      %s74 = sphi 0, %s72
      %s75 = sphi 0, %s74
      %s89 = sphi 0, %s75
      %s95 = sphi 0, %s97
      %s98 = sphi 0, %s95
      %s99 = sphi 0, %s98
      %s115 = sphi 0, %s99
      %s121 = sphi 0, %s123
      %s124 = sphi 0, %s121
      %s125 = sphi 0, %s124
      %s141 = sphi 0, %s125
      %s147 = sphi 0, %s149
      %s150 = sphi 0, %s147
      %s151 = sphi 0, %s150
      %s167 = sphi 0, %s151
      %s173 = sphi 0, %s175
      %s176 = sphi 0, %s173
      %s177 = sphi 0, %s176
      %s193 = sphi 0, %s177
      %s199 = sphi 0, %s201
      %s202 = sphi 0, %s199
      %s203 = sphi 0, %s202
      %s219 = sphi 0, %s203
      %s223 = sphi 0, %s223
      %s225 = sphi 0, %s223
      %s226 = sphi 0, %s225
      %s240 = sphi 0, %s226
      %s244 = sphi 0, %s244
      %s246 = sphi 0, %s244
      %s247 = sphi 0, %s246
      %s261 = sphi 0, %s247
      %s265 = sphi 0, %s265
      %s267 = sphi 0, %s265
      %s268 = sphi 0, %s267
      %s282 = sphi 0, %s268
      %s286 = sphi 0, %s286
      %s288 = sphi 0, %s286
      %s289 = sphi 0, %s288
      %s303 = sphi 0, %s289
      %s307 = sphi 0, %s307
      %s309 = sphi 0, %s307
      %s310 = sphi 0, %s309
      %s324 = sphi 0, %s310
      %s328 = sphi 0, %s328
      %s330 = sphi 0, %s328
      %s331 = sphi 0, %s330
      %s345 = sphi 0, %s331
    $region4: #{finbert_forward.1} parent=1 // loop_header_branch
      %25 = sbr.rel (%p23) target = $region8
    $region5: #{finbert_forward.1} parent=1 // loop_body
      %s27 = ssub.s32 %s22, 1
      %s28 = ssub.s32 %s22, 2
      %s29 = sadd.s32 %s22, 1
      %s31 = sadd.s32 %s30, 1
      %p34 = scmp.eq.s32.totalorder %s22, 1
      %p35 = scmp.ne.s32.totalorder %s30, %s32
      %p36 = scmp.eq.s32.totalorder %s22, 0
      %p37 = por %p35, %p36
      %p38 = scmp.ne.s32.totalorder %s30, %s32
      %p39 = scmp.eq.s32.totalorder %s27, 1
      %p40 = por %p38, %p39
      %p41 = scmp.ne.s32.totalorder %s32, %s33
      %p42 = scmp.eq.s32.totalorder %s27, 0
      %p43 = por %p41, %p42
      %p44 = scmp.ne.s32.totalorder %s32, %s33
      %p45 = scmp.eq.s32.totalorder %s28, 1
      %p46 = por %p44, %p45
      %p48 = scmp.ne.s32.totalorder %s33, %s47
      %p49 = scmp.eq.s32.totalorder %s28, 0
      %p50 = por %p48, %p49
      %s52 = sadd.s32 %s51, 1
      %p55 = scmp.eq.s32.totalorder %s22, 1
      %p56 = scmp.ne.s32.totalorder %s51, %s53
      %p57 = scmp.eq.s32.totalorder %s22, 0
      %p58 = por %p56, %p57
      %p59 = scmp.ne.s32.totalorder %s51, %s53
      %p60 = scmp.eq.s32.totalorder %s27, 1
      %p61 = por %p59, %p60
      %p62 = scmp.ne.s32.totalorder %s53, %s54
      %p63 = scmp.eq.s32.totalorder %s27, 0
      %p64 = por %p62, %p63
      %p65 = scmp.ne.s32.totalorder %s53, %s54
      %p66 = scmp.eq.s32.totalorder %s28, 1
      %p67 = por %p65, %p66
      %p69 = scmp.ne.s32.totalorder %s54, %s68
      %p70 = scmp.eq.s32.totalorder %s28, 0
      %p71 = por %p69, %p70
      %s73 = sadd.s32 %s72, 1
      %p76 = scmp.eq.s32.totalorder %s22, 1
      %p77 = scmp.ne.s32.totalorder %s72, %s74
      %p78 = scmp.eq.s32.totalorder %s22, 0
      %p79 = por %p77, %p78
      %p80 = scmp.ne.s32.totalorder %s72, %s74
      %p81 = scmp.eq.s32.totalorder %s27, 1
      %p82 = por %p80, %p81
      %p83 = scmp.ne.s32.totalorder %s74, %s75
      %p84 = scmp.eq.s32.totalorder %s27, 0
      %p85 = por %p83, %p84
      %p86 = scmp.ne.s32.totalorder %s74, %s75
      %p87 = scmp.eq.s32.totalorder %s28, 1
      %p88 = por %p86, %p87
      %p90 = scmp.ne.s32.totalorder %s75, %s89
      %p91 = scmp.eq.s32.totalorder %s28, 0
      %p92 = por %p90, %p91
      %s93 = ssub.s32 %s22, %s29
      %p94 = scmp.eq.s32.totalorder %s93, 0
      %s96 = sadd.s32 %s95, 1
      %s97 = scalar_select %p94, %s95, %s96
      %p100 = pneg %p94
      %p101 = scmp.eq.s32.totalorder %s22, 1
      %p102 = por %p100, %p101
      %p103 = scmp.ne.s32.totalorder %s95, %s98
      %p104 = scmp.eq.s32.totalorder %s22, 0
      %p105 = por %p103, %p104
      %p106 = scmp.ne.s32.totalorder %s95, %s98
      %p107 = scmp.eq.s32.totalorder %s27, 1
      %p108 = por %p106, %p107
      %p109 = scmp.ne.s32.totalorder %s98, %s99
      %p110 = scmp.eq.s32.totalorder %s27, 0
      %p111 = por %p109, %p110
      %p112 = scmp.ne.s32.totalorder %s98, %s99
      %p113 = scmp.eq.s32.totalorder %s28, 1
      %p114 = por %p112, %p113
      %p116 = scmp.ne.s32.totalorder %s99, %s115
      %p117 = scmp.eq.s32.totalorder %s28, 0
      %p118 = por %p116, %p117
      %s119 = ssub.s32 %s22, %s29
      %p120 = scmp.eq.s32.totalorder %s119, 0
      %s122 = sadd.s32 %s121, 1
      %s123 = scalar_select %p120, %s121, %s122
      %p126 = pneg %p120
      %p127 = scmp.eq.s32.totalorder %s22, 1
      %p128 = por %p126, %p127
      %p129 = scmp.ne.s32.totalorder %s121, %s124
      %p130 = scmp.eq.s32.totalorder %s22, 0
      %p131 = por %p129, %p130
      %p132 = scmp.ne.s32.totalorder %s121, %s124
      %p133 = scmp.eq.s32.totalorder %s27, 1
      %p134 = por %p132, %p133
      %p135 = scmp.ne.s32.totalorder %s124, %s125
      %p136 = scmp.eq.s32.totalorder %s27, 0
      %p137 = por %p135, %p136
      %p138 = scmp.ne.s32.totalorder %s124, %s125
      %p139 = scmp.eq.s32.totalorder %s28, 1
      %p140 = por %p138, %p139
      %p142 = scmp.ne.s32.totalorder %s125, %s141
      %p143 = scmp.eq.s32.totalorder %s28, 0
      %p144 = por %p142, %p143
      %s145 = ssub.s32 %s22, %s29
      %p146 = scmp.eq.s32.totalorder %s145, 0
      %s148 = sadd.s32 %s147, 1
      %s149 = scalar_select %p146, %s147, %s148
      %p152 = pneg %p146
      %p153 = scmp.eq.s32.totalorder %s22, 1
      %p154 = por %p152, %p153
      %p155 = scmp.ne.s32.totalorder %s147, %s150
      %p156 = scmp.eq.s32.totalorder %s22, 0
      %p157 = por %p155, %p156
      %p158 = scmp.ne.s32.totalorder %s147, %s150
      %p159 = scmp.eq.s32.totalorder %s27, 1
      %p160 = por %p158, %p159
      %p161 = scmp.ne.s32.totalorder %s150, %s151
      %p162 = scmp.eq.s32.totalorder %s27, 0
      %p163 = por %p161, %p162
      %p164 = scmp.ne.s32.totalorder %s150, %s151
      %p165 = scmp.eq.s32.totalorder %s28, 1
      %p166 = por %p164, %p165
      %p168 = scmp.ne.s32.totalorder %s151, %s167
      %p169 = scmp.eq.s32.totalorder %s28, 0
      %p170 = por %p168, %p169
      %s171 = ssub.s32 %s22, %s29
      %p172 = scmp.eq.s32.totalorder %s171, 0
      %s174 = sadd.s32 %s173, 1
      %s175 = scalar_select %p172, %s173, %s174
      %p178 = pneg %p172
      %p179 = scmp.eq.s32.totalorder %s22, 1
      %p180 = por %p178, %p179
      %p181 = scmp.ne.s32.totalorder %s173, %s176
      %p182 = scmp.eq.s32.totalorder %s22, 0
      %p183 = por %p181, %p182
      %p184 = scmp.ne.s32.totalorder %s173, %s176
      %p185 = scmp.eq.s32.totalorder %s27, 1
      %p186 = por %p184, %p185
      %p187 = scmp.ne.s32.totalorder %s176, %s177
      %p188 = scmp.eq.s32.totalorder %s27, 0
      %p189 = por %p187, %p188
      %p190 = scmp.ne.s32.totalorder %s176, %s177
      %p191 = scmp.eq.s32.totalorder %s28, 1
      %p192 = por %p190, %p191
      %p194 = scmp.ne.s32.totalorder %s177, %s193
      %p195 = scmp.eq.s32.totalorder %s28, 0
      %p196 = por %p194, %p195
      %s197 = ssub.s32 %s22, %s29
      %p198 = scmp.eq.s32.totalorder %s197, 0
      %s200 = sadd.s32 %s199, 1
      %s201 = scalar_select %p198, %s199, %s200
      %p204 = pneg %p198
      %p205 = scmp.eq.s32.totalorder %s22, 1
      %p206 = por %p204, %p205
      %p207 = scmp.ne.s32.totalorder %s199, %s202
      %p208 = scmp.eq.s32.totalorder %s22, 0
      %p209 = por %p207, %p208
      %p210 = scmp.ne.s32.totalorder %s199, %s202
      %p211 = scmp.eq.s32.totalorder %s27, 1
      %p212 = por %p210, %p211
      %p213 = scmp.ne.s32.totalorder %s202, %s203
      %p214 = scmp.eq.s32.totalorder %s27, 0
      %p215 = por %p213, %p214
      %p216 = scmp.ne.s32.totalorder %s202, %s203
      %p217 = scmp.eq.s32.totalorder %s28, 1
      %p218 = por %p216, %p217
      %p220 = scmp.ne.s32.totalorder %s203, %s219
      %p221 = scmp.eq.s32.totalorder %s28, 0
      %p222 = por %p220, %p221
      %s224 = sadd.s32 %s223, 1
      %p227 = scmp.eq.s32.totalorder %s22, 1
      %p228 = scmp.ne.s32.totalorder %s223, %s225
      %p229 = scmp.eq.s32.totalorder %s22, 0
      %p230 = por %p228, %p229
      %p231 = scmp.ne.s32.totalorder %s223, %s225
      %p232 = scmp.eq.s32.totalorder %s27, 1
      %p233 = por %p231, %p232
      %p234 = scmp.ne.s32.totalorder %s225, %s226
      %p235 = scmp.eq.s32.totalorder %s27, 0
      %p236 = por %p234, %p235
      %p237 = scmp.ne.s32.totalorder %s225, %s226
      %p238 = scmp.eq.s32.totalorder %s28, 1
      %p239 = por %p237, %p238
      %p241 = scmp.ne.s32.totalorder %s226, %s240
      %p242 = scmp.eq.s32.totalorder %s28, 0
      %p243 = por %p241, %p242
      %s245 = sadd.s32 %s244, 1
      %p248 = scmp.eq.s32.totalorder %s22, 1
      %p249 = scmp.ne.s32.totalorder %s244, %s246
      %p250 = scmp.eq.s32.totalorder %s22, 0
      %p251 = por %p249, %p250
      %p252 = scmp.ne.s32.totalorder %s244, %s246
      %p253 = scmp.eq.s32.totalorder %s27, 1
      %p254 = por %p252, %p253
      %p255 = scmp.ne.s32.totalorder %s246, %s247
      %p256 = scmp.eq.s32.totalorder %s27, 0
      %p257 = por %p255, %p256
      %p258 = scmp.ne.s32.totalorder %s246, %s247
      %p259 = scmp.eq.s32.totalorder %s28, 1
      %p260 = por %p258, %p259
      %p262 = scmp.ne.s32.totalorder %s247, %s261
      %p263 = scmp.eq.s32.totalorder %s28, 0
      %p264 = por %p262, %p263
      %s266 = sadd.s32 %s265, 1
      %p269 = scmp.eq.s32.totalorder %s22, 1
      %p270 = scmp.ne.s32.totalorder %s265, %s267
      %p271 = scmp.eq.s32.totalorder %s22, 0
      %p272 = por %p270, %p271
      %p273 = scmp.ne.s32.totalorder %s265, %s267
      %p274 = scmp.eq.s32.totalorder %s27, 1
      %p275 = por %p273, %p274
      %p276 = scmp.ne.s32.totalorder %s267, %s268
      %p277 = scmp.eq.s32.totalorder %s27, 0
      %p278 = por %p276, %p277
      %p279 = scmp.ne.s32.totalorder %s267, %s268
      %p280 = scmp.eq.s32.totalorder %s28, 1
      %p281 = por %p279, %p280
      %p283 = scmp.ne.s32.totalorder %s268, %s282
      %p284 = scmp.eq.s32.totalorder %s28, 0
      %p285 = por %p283, %p284
      %s287 = sadd.s32 %s286, 1
      %p290 = scmp.eq.s32.totalorder %s22, 1
      %p291 = scmp.ne.s32.totalorder %s286, %s288
      %p292 = scmp.eq.s32.totalorder %s22, 0
      %p293 = por %p291, %p292
      %p294 = scmp.ne.s32.totalorder %s286, %s288
      %p295 = scmp.eq.s32.totalorder %s27, 1
      %p296 = por %p294, %p295
      %p297 = scmp.ne.s32.totalorder %s288, %s289
      %p298 = scmp.eq.s32.totalorder %s27, 0
      %p299 = por %p297, %p298
      %p300 = scmp.ne.s32.totalorder %s288, %s289
      %p301 = scmp.eq.s32.totalorder %s28, 1
      %p302 = por %p300, %p301
      %p304 = scmp.ne.s32.totalorder %s289, %s303
      %p305 = scmp.eq.s32.totalorder %s28, 0
      %p306 = por %p304, %p305
      %s308 = sadd.s32 %s307, 1
      %p311 = scmp.eq.s32.totalorder %s22, 1
      %p312 = scmp.ne.s32.totalorder %s307, %s309
      %p313 = scmp.eq.s32.totalorder %s22, 0
      %p314 = por %p312, %p313
      %p315 = scmp.ne.s32.totalorder %s307, %s309
      %p316 = scmp.eq.s32.totalorder %s27, 1
      %p317 = por %p315, %p316
      %p318 = scmp.ne.s32.totalorder %s309, %s310
      %p319 = scmp.eq.s32.totalorder %s27, 0
      %p320 = por %p318, %p319
      %p321 = scmp.ne.s32.totalorder %s309, %s310
      %p322 = scmp.eq.s32.totalorder %s28, 1
      %p323 = por %p321, %p322
      %p325 = scmp.ne.s32.totalorder %s310, %s324
      %p326 = scmp.eq.s32.totalorder %s28, 0
      %p327 = por %p325, %p326
      %s329 = sadd.s32 %s328, 1
      %p332 = scmp.eq.s32.totalorder %s22, 1
      %p333 = scmp.ne.s32.totalorder %s328, %s330
      %p334 = scmp.eq.s32.totalorder %s22, 0
      %p335 = por %p333, %p334
      %p336 = scmp.ne.s32.totalorder %s328, %s330
      %p337 = scmp.eq.s32.totalorder %s27, 1
      %p338 = por %p336, %p337
      %p339 = scmp.ne.s32.totalorder %s330, %s331
      %p340 = scmp.eq.s32.totalorder %s27, 0
      %p341 = por %p339, %p340
      %p342 = scmp.ne.s32.totalorder %s330, %s331
      %p343 = scmp.eq.s32.totalorder %s28, 1
      %p344 = por %p342, %p343
      %p346 = scmp.ne.s32.totalorder %s331, %s345
      %p347 = scmp.eq.s32.totalorder %s28, 0
      %p348 = por %p346, %p347
      %p349 = scmp.le.s32.totalorder 1, %s22
      %p350 = scmp.lt.s32.totalorder %s22, 3
      %p351 = pnand %p349, %p350
      %p352 = pneg %p351
      // Predicated region
      $region9: #{finbert_forward.1} parent=5 // pred_check
        _
      $region10: #{finbert_forward.1} parent=5 // pred_check_branch
        %354 = sbr.rel (%p351) target = $region12
      $region11: #{finbert_forward.1} parent=5 // pred_region
        %s355 = ssub.s32 %s22, 1
        // Predicated region
        $region13: #{finbert_forward.1} parent=11 // pred_check
          %p356 = pneg %p43
        $region14: #{finbert_forward.1} parent=11 // pred_check_branch
          %358 = sbr.rel (%p356) target = $region16
        $region15: #{finbert_forward.1} parent=11 // pred_region
          _
        $region16: #{finbert_forward.1} parent=11 // pred_fallthru
          _
        // Predicated region
        $region17: #{finbert_forward.1} parent=11 // pred_check
          %p359 = pneg %p64
        $region18: #{finbert_forward.1} parent=11 // pred_check_branch
          %361 = sbr.rel (%p359) target = $region20
        $region19: #{finbert_forward.1} parent=11 // pred_region
          _
        $region20: #{finbert_forward.1} parent=11 // pred_fallthru
          _
        // Predicated region
        $region21: #{finbert_forward.1} parent=11 // pred_check
          %p362 = pneg %p85
        $region22: #{finbert_forward.1} parent=11 // pred_check_branch
          %364 = sbr.rel (%p362) target = $region24
        $region23: #{finbert_forward.1} parent=11 // pred_region
          _
        $region24: #{finbert_forward.1} parent=11 // pred_fallthru
          _
        // Predicated region
        $region25: #{finbert_forward.1} parent=11 // pred_check
          %p365 = pneg %p236
        $region26: #{finbert_forward.1} parent=11 // pred_check_branch
          %367 = sbr.rel (%p365) target = $region28
        $region27: #{finbert_forward.1} parent=11 // pred_region
          _
        $region28: #{finbert_forward.1} parent=11 // pred_fallthru
          _
        // Predicated region
        $region29: #{finbert_forward.1} parent=11 // pred_check
          %p368 = pneg %p257
        $region30: #{finbert_forward.1} parent=11 // pred_check_branch
          %370 = sbr.rel (%p368) target = $region32
        $region31: #{finbert_forward.1} parent=11 // pred_region
          _
        $region32: #{finbert_forward.1} parent=11 // pred_fallthru
          _
        // Predicated region
        $region33: #{finbert_forward.1} parent=11 // pred_check
          %p371 = pneg %p278
        $region34: #{finbert_forward.1} parent=11 // pred_check_branch
          %373 = sbr.rel (%p371) target = $region36
        $region35: #{finbert_forward.1} parent=11 // pred_region
          _
        $region36: #{finbert_forward.1} parent=11 // pred_fallthru
          _
        // Predicated region
        $region37: #{finbert_forward.1} parent=11 // pred_check
          %p374 = pneg %p299
        $region38: #{finbert_forward.1} parent=11 // pred_check_branch
          %376 = sbr.rel (%p374) target = $region40
        $region39: #{finbert_forward.1} parent=11 // pred_region
          _
        $region40: #{finbert_forward.1} parent=11 // pred_fallthru
          _
      $region12: #{finbert_forward.1} parent=5 // pred_fallthru
        _
      %p377 = scmp.lt.s32.totalorder %s22, 2
      // Predicated region
      $region41: #{finbert_forward.1} parent=5 // pred_check
        %p378 = pneg %p377
      $region42: #{finbert_forward.1} parent=5 // pred_check_branch
        %380 = sbr.rel (%p378) target = $region44
      $region43: #{finbert_forward.1} parent=5 // pred_region
        // Predicated region
        $region45: #{finbert_forward.1} parent=43 // pred_check
          %p381 = pneg %p105
        $region46: #{finbert_forward.1} parent=43 // pred_check_branch
          %383 = sbr.rel (%p381) target = $region48
        $region47: #{finbert_forward.1} parent=43 // pred_region
          %p384 = scmp.lt.s32.totalorder %s22, 1
          %s385 = scalar_select %p384, %s22, 1
          %s386 = smul.addr %s385, 4
          %s387 = smul.addr %s386, 8
          %s388 = scalar_lea.vmem %s3, %s387
        $region48: #{finbert_forward.1} parent=43 // pred_fallthru
          _
        // Predicated region
        $region49: #{finbert_forward.1} parent=43 // pred_check
          %p389 = pneg %p131
        $region50: #{finbert_forward.1} parent=43 // pred_check_branch
          %391 = sbr.rel (%p389) target = $region52
        $region51: #{finbert_forward.1} parent=43 // pred_region
          %p392 = scmp.lt.s32.totalorder %s22, 1
          %s393 = scalar_select %p392, %s22, 1
          %s394 = smul.addr %s393, 4
          %s395 = smul.addr %s394, 8
          %s396 = scalar_lea.vmem %s4, %s395
        $region52: #{finbert_forward.1} parent=43 // pred_fallthru
          _
        // Predicated region
        $region53: #{finbert_forward.1} parent=43 // pred_check
          %p397 = pneg %p157
        $region54: #{finbert_forward.1} parent=43 // pred_check_branch
          %399 = sbr.rel (%p397) target = $region56
        $region55: #{finbert_forward.1} parent=43 // pred_region
          %p400 = scmp.lt.s32.totalorder %s22, 1
          %s401 = scalar_select %p400, %s22, 1
          %s402 = smul.addr %s401, 4
          %s403 = smul.addr %s402, 8
          %s404 = scalar_lea.vmem %s5, %s403
        $region56: #{finbert_forward.1} parent=43 // pred_fallthru
          _
        // Predicated region
        $region57: #{finbert_forward.1} parent=43 // pred_check
          %p405 = pneg %p183
        $region58: #{finbert_forward.1} parent=43 // pred_check_branch
          %407 = sbr.rel (%p405) target = $region60
        $region59: #{finbert_forward.1} parent=43 // pred_region
          %p408 = scmp.lt.s32.totalorder %s22, 1
          %s409 = scalar_select %p408, %s22, 1
          %s410 = smul.addr %s409, 16
          %s411 = smul.addr %s410, 8
          %s412 = scalar_lea.vmem %s6, %s411
        $region60: #{finbert_forward.1} parent=43 // pred_fallthru
          _
        // Predicated region
        $region61: #{finbert_forward.1} parent=43 // pred_check
          %p413 = pneg %p209
        $region62: #{finbert_forward.1} parent=43 // pred_check_branch
          %415 = sbr.rel (%p413) target = $region64
        $region63: #{finbert_forward.1} parent=43 // pred_region
          %p416 = scmp.lt.s32.totalorder %s22, 1
          %s417 = scalar_select %p416, %s22, 1
          %s418 = smul.addr %s417, 8
          %s419 = scalar_lea.vmem %s7, %s418
        $region64: #{finbert_forward.1} parent=43 // pred_fallthru
          _
      $region44: #{finbert_forward.1} parent=5 // pred_fallthru
        _
      %p420 = scmp.le.s32.totalorder 1, %s22
      %p421 = scmp.lt.s32.totalorder %s22, 3
      %p422 = pnand %p420, %p421
      %p423 = pneg %p422
      // Predicated region
      $region65: #{finbert_forward.1} parent=5 // pred_check
        _
      $region66: #{finbert_forward.1} parent=5 // pred_check_branch
        %425 = sbr.rel (%p422) target = $region68
      $region67: #{finbert_forward.1} parent=5 // pred_region
        %s426 = ssub.s32 %s22, 1
        %p427 = pneg %p43
        %p428 = pneg %p40
        %p429 = pneg %p64
        %p430 = pneg %p61
        %p431 = pneg %p85
        %p432 = pneg %p82
        %p433 = scmp.lt.s32.totalorder %s27, 1
        %s434 = scalar_select %p433, %s27, 1
        %s435 = smul.addr %s434, 4
        %s436 = smul.addr %s435, 8
        %s437 = scalar_lea.vmem %s3, %s436
        %p438 = pneg %p111
        %p439 = pneg %p108
        %p440 = scmp.lt.s32.totalorder %s27, 1
        %s441 = scalar_select %p440, %s27, 1
        %s442 = smul.addr %s441, 4
        %s443 = smul.addr %s442, 8
        %s444 = scalar_lea.vmem %s4, %s443
        %p445 = pneg %p137
        %p446 = pneg %p134
        %p447 = scmp.lt.s32.totalorder %s27, 1
        %s448 = scalar_select %p447, %s27, 1
        %s449 = smul.addr %s448, 4
        %s450 = smul.addr %s449, 8
        %s451 = scalar_lea.vmem %s5, %s450
        %p452 = pneg %p163
        %p453 = pneg %p160
        %p454 = scmp.lt.s32.totalorder %s27, 1
        %s455 = scalar_select %p454, %s27, 1
        %s456 = smul.addr %s455, 16
        %s457 = smul.addr %s456, 8
        %s458 = scalar_lea.vmem %s6, %s457
        %p459 = pneg %p189
        %p460 = pneg %p186
        %p461 = scmp.lt.s32.totalorder %s27, 1
        %s462 = scalar_select %p461, %s27, 1
        %s463 = smul.addr %s462, 8
        %s464 = scalar_lea.vmem %s7, %s463
        %p465 = pneg %p215
        %p466 = pneg %p212
        %p467 = pneg %p236
        %p468 = pneg %p233
        %p469 = pneg %p257
        %p470 = pneg %p254
        %p471 = pneg %p278
        %p472 = pneg %p275
        %p473 = pneg %p299
        %p474 = pneg %p296
        %p475 = pneg %p320
        %p476 = pneg %p317
        %p477 = pneg %p341
        %p478 = pneg %p338
        %p479 = scmp.lt.s32.totalorder %s27, 1
        %s480 = scalar_select %p479, %s27, 1
        %s481 = smul.addr %s480, 4
        %s482 = smul.addr %s481, 8
        %s483 = scalar_lea.vmem %s3, %s482
        %p484 = scmp.lt.s32.totalorder %s27, 1
        %s485 = scalar_select %p484, %s27, 1
        %s486 = smul.addr %s485, 4
        %s487 = smul.addr %s486, 8
        %s488 = scalar_lea.vmem %s4, %s487
        %p489 = scmp.lt.s32.totalorder %s27, 1
        %s490 = scalar_select %p489, %s27, 1
        %s491 = smul.addr %s490, 4
        %s492 = smul.addr %s491, 8
        %s493 = scalar_lea.vmem %s5, %s492
        %p494 = scmp.lt.s32.totalorder %s27, 1
        %s495 = scalar_select %p494, %s27, 1
        %s496 = smul.addr %s495, 16
        %s497 = smul.addr %s496, 8
        %s498 = scalar_lea.vmem %s6, %s497
        %p499 = scmp.lt.s32.totalorder %s27, 1
        %s500 = scalar_select %p499, %s27, 1
        %s501 = smul.addr %s500, 8
        %s502 = scalar_lea.vmem %s7, %s501
        %p503 = scmp.eq.s32.totalorder %s27, 0
        // Predicated region
        $region69: #{finbert_forward.1} parent=67 // pred_check
          %p504 = pneg %p503
        $region70: #{finbert_forward.1} parent=67 // pred_check_branch
          %506 = sbr.rel (%p504) target = $region72
        $region71: #{finbert_forward.1} parent=67 // pred_region
          %v507 = vld [vmem:[%s0] sm:$0xff]
          %v508 = vld [vmem:[%s0 + $0x8] sm:$0xff]
          %v509 = vld [vmem:[%s2] sm:$0x1]
          %v510 = vld [vmem:[%s2 + $0x1] sm:$0x1]
          %vm511 = vcmask 261120
          %v512 = vsel %vm511, %v507, 0.0
          %513 = vadd.xlane.f32.xlu0 %v512
          %v514 = vpop.xlane.xlu0 %513
          %v515 = vsel %vm511, %v508, 0.0
          %516 = vadd.xlane.f32.xlu0 %v515
          %v517 = vpop.xlane.xlu0 %516
          %v518 = vrcp.pop 32.0
          %v519 = vmul.f32 32.0, %v518
          %v520 = vsub.f32 1.0, %v519
          %v521 = vmul.f32 %v518, %v520
          %v522 = vadd.f32 %v518, %v521
          %vm523 = vweird.f32 %v518
          %v524 = vsel %vm523, %v518, %v522
          %v525 = vmul.f32 %v514, %v524
          %v526 = vmul.f32 %v517, %v524
          %v527 = vsub.f32 %v507, %v525
          %v528 = vsub.f32 %v508, %v526
          %v529 = vmul.f32 %v527, %v527
          %v530 = vmul.f32 %v528, %v528
          %v531 = vsel %vm511, %v529, 0.0
          %532 = vadd.xlane.f32.xlu0 %v531
          %v533 = vpop.xlane.xlu0 %532
          %v534 = vsel %vm511, %v530, 0.0
          %535 = vadd.xlane.f32.xlu0 %v534
          %v536 = vpop.xlane.xlu0 %535
          %v537 = vmul.f32 %v533, %v524
          %v538 = vmul.f32 %v536, %v524
          %v539 = vadd.f32 %v537, 1e-12
          %v540 = vadd.f32 %v538, 1e-12
          %v541 = vrsqrt.pop %v539
          %v542 = vmul.f32 %v541, %v539
          %v543 = vmul.f32 %v542, %v541
          %v544 = vmul.f32 0.5, %v543
          %v545 = vsub.f32 1.5, %v544
          %v546 = vmul.f32 %v541, %v545
          %vm547 = vweird.f32 %v539
          %vm548 = vweird.f32 %v541
          %vm549 = vmor %vm547, %vm548
          %v550 = vsel %vm549, %v541, %v546
          %v551 = vrsqrt.pop %v540
          %v552 = vmul.f32 %v551, %v540
          %v553 = vmul.f32 %v552, %v551
          %v554 = vmul.f32 0.5, %v553
          %v555 = vsub.f32 1.5, %v554
          %v556 = vmul.f32 %v551, %v555
          %vm557 = vweird.f32 %v540
          %vm558 = vweird.f32 %v551
          %vm559 = vmor %vm557, %vm558
          %v560 = vsel %vm559, %v551, %v556
          %v561 = vmul.f32 %v527, %v550
          %v562 = vmul.f32 %v528, %v560
          %v563 = vperm.slane %v509, 0
          %v564 = vmul.f32 %v561, %v563
          %v565 = vmul.f32 %v562, %v563
          %v566 = vperm.slane %v510, 0
          %v567 = vadd.f32 %v564, %v566
          %v568 = vadd.f32 %v565, %v566
          %569 = vst.msk [vmem:[#allocation2] sm:$0xff] %vm511, %v567
          %570 = vst.msk [vmem:[#allocation2 + $0x8] sm:$0xff] %vm511, %v568
        $region72: #{finbert_forward.1} parent=67 // pred_fallthru
          _
        %v571 = vld [vmem:[#allocation2] sm:$0xff]
        %v572 = vld [vmem:[#allocation2 + $0x8] sm:$0xff]
        %v573 = vld [vmem:[%s502] sm:$0xff]
        %v574 = vld [vmem:[%s483] sm:$0xff]
        %v575 = vld [vmem:[%s483 + $0x8] sm:$0xff]
        %v576 = vld [vmem:[%s483 + $0x10] sm:$0xff]
        %v577 = vld [vmem:[%s483 + $0x18] sm:$0xff]
        %v578 = vperm.slane %v573, 0
        %vm579 = vcmask 261120
        %v581 = vsel %vm579, %v571, 0
        %v584 = vsel %vm579, %v572, 0
        %586 = vmatpush.msra.mxu0 0.0
        %587 = vmatpush.msra.mxu0 0.0
        %588 = vmatpush.msra.mxu0 0.0
        %589 = vmatpush.msra.mxu0 0.0
        %590 = vmatpush.msra.mxu0 0.0
        %591 = vmatpush.msra.mxu0 0.0
        %592 = vmatpush.msra.mxu0 0.0
        %593 = vmatpush.msra.mxu0 0.0
        %594 = vmatpush.msra.mxu0 0.0
        %595 = vmatpush.msra.mxu0 0.0
        %596 = vmatpush.msra.mxu0 0.0
        %597 = vmatpush.msra.mxu0 0.0
        %598 = vmatpush.msra.mxu0 %v577
        %599 = vmatpush.msra.mxu0 %v576
        %600 = vmatpush.msra.mxu0 %v575
        %601 = vmatpush.msra.mxu0 %v574
        %602 = vmatmul.f32.gmra.mxu0 %v581
        %v603 = vpop.f32.mrf.mxu0
        %v604 = vadd.f32 %v578, %v603
        %605 = vmatmul.f32.gmra.mxu0 %v584
        %v606 = vpop.f32.mrf.mxu0
        %v607 = vadd.f32 %v578, %v606
        %608 = vdwg.mxu0
        %v609 = vld [vmem:[%s1] sm:$0x1]
        %v610 = vperm.slane %v609, 0
        %612 = vrot.lane.b32.xlu0 %v604, 96
        %v613 = vpop.permute.xlu0 %612
        %vm614 = vcmask 64512
        %v615 = vsel %vm614, %v604, 0
        %v617 = vsel %vm614, %v613, 0
        %619 = vmatpush.xpose.msra.mxu0 0.0
        %620 = vmatpush.xpose.msra.mxu0 0.0
        %621 = vmatpush.xpose.msra.mxu0 0.0
        %622 = vmatpush.xpose.msra.mxu0 0.0
        %623 = vmatpush.xpose.msra.mxu0 0.0
        %624 = vmatpush.xpose.msra.mxu0 0.0
        %625 = vmatpush.xpose.msra.mxu0 0.0
        %626 = vmatpush.xpose.msra.mxu0 0.0
        %627 = vmatpush.xpose.msra.mxu0 0.0
        %628 = vmatpush.xpose.msra.mxu0 0.0
        %629 = vmatpush.xpose.msra.mxu0 0.0
        %630 = vmatpush.xpose.msra.mxu0 0.0
        %631 = vmatpush.xpose.msra.mxu0 0.0
        %632 = vmatpush.xpose.msra.mxu0 0.0
        %633 = vmatpush.xpose.msra.mxu0 0.0
        %634 = vmatpush.xpose.msra.mxu0 %v617
        %635 = vmatmul.f32.gmra.mxu0 %v615
        %v636 = vpop.f32.mrf.mxu0
        %v637 = vadd.f32 %v610, %v636
        %638 = vdwg.mxu0
        %v639 = vsel %vm614, %v637, -inf
        %640 = vmax.xlane.f32.xlu0 %v639
        %v641 = vpop.xlane.xlu0 %640
        %v642 = vsub.f32 %v637, %v641
        %v643 = vmul.f32 %v642, 1.442695
        %v644 = vpow.pop %v643
        %v645 = vsel %vm614, %v644, 0.0
        %646 = vadd.xlane.f32.xlu0 %v645
        %v647 = vpop.xlane.xlu0 %646
        %v648 = vrcp.pop %v647
        %v649 = vmul.f32 %v644, %v648
        %650 = vrot.lane.b32.xlu0 %v604, 64
        %v651 = vpop.permute.xlu0 %650
        %v654 = vsel %vm614, %v649, 0
        %656 = vmatpush.msra.mxu0 0.0
        %657 = vmatpush.msra.mxu0 0.0
        %658 = vmatpush.msra.mxu0 0.0
        %659 = vmatpush.msra.mxu0 0.0
        %660 = vmatpush.msra.mxu0 0.0
        %661 = vmatpush.msra.mxu0 0.0
        %662 = vmatpush.msra.mxu0 0.0
        %663 = vmatpush.msra.mxu0 0.0
        %664 = vmatpush.msra.mxu0 0.0
        %665 = vmatpush.msra.mxu0 0.0
        %666 = vmatpush.msra.mxu0 0.0
        %667 = vmatpush.msra.mxu0 0.0
        %668 = vmatpush.msra.mxu0 0.0
        %669 = vmatpush.msra.mxu0 0.0
        %670 = vmatpush.msra.mxu0 0.0
        %671 = vmatpush.msra.mxu0 %v651
        %672 = vmatmul.f32.gmra.mxu0 %v654
        %v673 = vpop.f32.mrf.mxu0
        %v674 = vadd.f32 0.0, %v673
        %675 = vdwg.mxu0
        %676 = vrot.lane.b32.xlu0 %v604, 120
        %v677 = vpop.permute.xlu0 %676
        %678 = vrot.lane.b32.xlu0 %v604, 88
        %v679 = vpop.permute.xlu0 %678
        %v680 = vsel %vm614, %v677, 0
        %v682 = vsel %vm614, %v679, 0
        %684 = vmatpush.xpose.msra.mxu0 0.0
        %685 = vmatpush.xpose.msra.mxu0 0.0
        %686 = vmatpush.xpose.msra.mxu0 0.0
        %687 = vmatpush.xpose.msra.mxu0 0.0
        %688 = vmatpush.xpose.msra.mxu0 0.0
        %689 = vmatpush.xpose.msra.mxu0 0.0
        %690 = vmatpush.xpose.msra.mxu0 0.0
        %691 = vmatpush.xpose.msra.mxu0 0.0
        %692 = vmatpush.xpose.msra.mxu0 0.0
        %693 = vmatpush.xpose.msra.mxu0 0.0
        %694 = vmatpush.xpose.msra.mxu0 0.0
        %695 = vmatpush.xpose.msra.mxu0 0.0
        %696 = vmatpush.xpose.msra.mxu0 0.0
        %697 = vmatpush.xpose.msra.mxu0 0.0
        %698 = vmatpush.xpose.msra.mxu0 0.0
        %699 = vmatpush.xpose.msra.mxu0 %v682
        %700 = vmatmul.f32.gmra.mxu0 %v680
        %v701 = vpop.f32.mrf.mxu0
        %v702 = vadd.f32 %v610, %v701
        %703 = vdwg.mxu0
        %v704 = vsel %vm614, %v702, -inf
        %705 = vmax.xlane.f32.xlu0 %v704
        %v706 = vpop.xlane.xlu0 %705
        %v707 = vsub.f32 %v702, %v706
        %v708 = vmul.f32 %v707, 1.442695
        %v709 = vpow.pop %v708
        %v710 = vsel %vm614, %v709, 0.0
        %711 = vadd.xlane.f32.xlu0 %v710
        %v712 = vpop.xlane.xlu0 %711
        %v713 = vrcp.pop %v712
        %v714 = vmul.f32 %v709, %v713
        %715 = vrot.lane.b32.xlu0 %v604, 56
        %v716 = vpop.permute.xlu0 %715
        %v719 = vsel %vm614, %v714, 0
        %721 = vmatpush.msra.mxu0 0.0
        %722 = vmatpush.msra.mxu0 0.0
        %723 = vmatpush.msra.mxu0 0.0
        %724 = vmatpush.msra.mxu0 0.0
        %725 = vmatpush.msra.mxu0 0.0
        %726 = vmatpush.msra.mxu0 0.0
        %727 = vmatpush.msra.mxu0 0.0
        %728 = vmatpush.msra.mxu0 0.0
        %729 = vmatpush.msra.mxu0 0.0
        %730 = vmatpush.msra.mxu0 0.0
        %731 = vmatpush.msra.mxu0 0.0
        %732 = vmatpush.msra.mxu0 0.0
        %733 = vmatpush.msra.mxu0 0.0
        %734 = vmatpush.msra.mxu0 0.0
        %735 = vmatpush.msra.mxu0 0.0
        %736 = vmatpush.msra.mxu0 %v716
        %737 = vmatmul.f32.gmra.mxu0 %v719
        %v738 = vpop.f32.mrf.mxu0
        %v739 = vadd.f32 0.0, %v738
        %740 = vdwg.mxu0
        %741 = vrot.lane.b32.xlu0 %v604, 112
        %v742 = vpop.permute.xlu0 %741
        %743 = vrot.lane.b32.xlu0 %v604, 80
        %v744 = vpop.permute.xlu0 %743
        %v745 = vsel %vm614, %v742, 0
        %v747 = vsel %vm614, %v744, 0
        %749 = vmatpush.xpose.msra.mxu0 0.0
        %750 = vmatpush.xpose.msra.mxu0 0.0
        %751 = vmatpush.xpose.msra.mxu0 0.0
        %752 = vmatpush.xpose.msra.mxu0 0.0
        %753 = vmatpush.xpose.msra.mxu0 0.0
        %754 = vmatpush.xpose.msra.mxu0 0.0
        %755 = vmatpush.xpose.msra.mxu0 0.0
        %756 = vmatpush.xpose.msra.mxu0 0.0
        %757 = vmatpush.xpose.msra.mxu0 0.0
        %758 = vmatpush.xpose.msra.mxu0 0.0
        %759 = vmatpush.xpose.msra.mxu0 0.0
        %760 = vmatpush.xpose.msra.mxu0 0.0
        %761 = vmatpush.xpose.msra.mxu0 0.0
        %762 = vmatpush.xpose.msra.mxu0 0.0
        %763 = vmatpush.xpose.msra.mxu0 0.0
        %764 = vmatpush.xpose.msra.mxu0 %v747
        %765 = vmatmul.f32.gmra.mxu0 %v745
        %v766 = vpop.f32.mrf.mxu0
        %v767 = vadd.f32 %v610, %v766
        %768 = vdwg.mxu0
        %v769 = vsel %vm614, %v767, -inf
        %770 = vmax.xlane.f32.xlu0 %v769
        %v771 = vpop.xlane.xlu0 %770
        %v772 = vsub.f32 %v767, %v771
        %v773 = vmul.f32 %v772, 1.442695
        %v774 = vpow.pop %v773
        %v775 = vsel %vm614, %v774, 0.0
        %776 = vadd.xlane.f32.xlu0 %v775
        %v777 = vpop.xlane.xlu0 %776
        %v778 = vrcp.pop %v777
        %v779 = vmul.f32 %v774, %v778
        %780 = vrot.lane.b32.xlu0 %v604, 48
        %v781 = vpop.permute.xlu0 %780
        %v784 = vsel %vm614, %v779, 0
        %786 = vmatpush.msra.mxu0 0.0
        %787 = vmatpush.msra.mxu0 0.0
        %788 = vmatpush.msra.mxu0 0.0
        %789 = vmatpush.msra.mxu0 0.0
        %790 = vmatpush.msra.mxu0 0.0
        %791 = vmatpush.msra.mxu0 0.0
        %792 = vmatpush.msra.mxu0 0.0
        %793 = vmatpush.msra.mxu0 0.0
        %794 = vmatpush.msra.mxu0 0.0
        %795 = vmatpush.msra.mxu0 0.0
        %796 = vmatpush.msra.mxu0 0.0
        %797 = vmatpush.msra.mxu0 0.0
        %798 = vmatpush.msra.mxu0 0.0
        %799 = vmatpush.msra.mxu0 0.0
        %800 = vmatpush.msra.mxu0 0.0
        %801 = vmatpush.msra.mxu0 %v781
        %802 = vmatmul.f32.gmra.mxu0 %v784
        %v803 = vpop.f32.mrf.mxu0
        %v804 = vadd.f32 0.0, %v803
        %805 = vdwg.mxu0
        %806 = vrot.lane.b32.xlu0 %v604, 104
        %v807 = vpop.permute.xlu0 %806
        %808 = vrot.lane.b32.xlu0 %v604, 72
        %v809 = vpop.permute.xlu0 %808
        %v810 = vsel %vm614, %v807, 0
        %v812 = vsel %vm614, %v809, 0
        %814 = vmatpush.xpose.msra.mxu0 0.0
        %815 = vmatpush.xpose.msra.mxu0 0.0
        %816 = vmatpush.xpose.msra.mxu0 0.0
        %817 = vmatpush.xpose.msra.mxu0 0.0
        %818 = vmatpush.xpose.msra.mxu0 0.0
        %819 = vmatpush.xpose.msra.mxu0 0.0
        %820 = vmatpush.xpose.msra.mxu0 0.0
        %821 = vmatpush.xpose.msra.mxu0 0.0
        %822 = vmatpush.xpose.msra.mxu0 0.0
        %823 = vmatpush.xpose.msra.mxu0 0.0
        %824 = vmatpush.xpose.msra.mxu0 0.0
        %825 = vmatpush.xpose.msra.mxu0 0.0
        %826 = vmatpush.xpose.msra.mxu0 0.0
        %827 = vmatpush.xpose.msra.mxu0 0.0
        %828 = vmatpush.xpose.msra.mxu0 0.0
        %829 = vmatpush.xpose.msra.mxu0 %v812
        %830 = vmatmul.f32.gmra.mxu0 %v810
        %v831 = vpop.f32.mrf.mxu0
        %v832 = vadd.f32 %v610, %v831
        %833 = vdwg.mxu0
        %v834 = vsel %vm614, %v832, -inf
        %835 = vmax.xlane.f32.xlu0 %v834
        %v836 = vpop.xlane.xlu0 %835
        %v837 = vsub.f32 %v832, %v836
        %v838 = vmul.f32 %v837, 1.442695
        %v839 = vpow.pop %v838
        %v840 = vsel %vm614, %v839, 0.0
        %841 = vadd.xlane.f32.xlu0 %v840
        %v842 = vpop.xlane.xlu0 %841
        %v843 = vrcp.pop %v842
        %v844 = vmul.f32 %v839, %v843
        %845 = vrot.lane.b32.xlu0 %v604, 40
        %v846 = vpop.permute.xlu0 %845
        %v849 = vsel %vm614, %v844, 0
        %851 = vmatpush.msra.mxu0 0.0
        %852 = vmatpush.msra.mxu0 0.0
        %853 = vmatpush.msra.mxu0 0.0
        %854 = vmatpush.msra.mxu0 0.0
        %855 = vmatpush.msra.mxu0 0.0
        %856 = vmatpush.msra.mxu0 0.0
        %857 = vmatpush.msra.mxu0 0.0
        %858 = vmatpush.msra.mxu0 0.0
        %859 = vmatpush.msra.mxu0 0.0
        %860 = vmatpush.msra.mxu0 0.0
        %861 = vmatpush.msra.mxu0 0.0
        %862 = vmatpush.msra.mxu0 0.0
        %863 = vmatpush.msra.mxu0 0.0
        %864 = vmatpush.msra.mxu0 0.0
        %865 = vmatpush.msra.mxu0 0.0
        %866 = vmatpush.msra.mxu0 %v846
        %867 = vmatmul.f32.gmra.mxu0 %v849
        %v868 = vpop.f32.mrf.mxu0
        %v869 = vadd.f32 0.0, %v868
        %870 = vdwg.mxu0
        %872 = vrot.lane.b32.xlu0 %v739, 8
        %v873 = vpop.permute.xlu0 %872
        %876 = vrot.lane.b32.xlu0 %v804, 16
        %v877 = vpop.permute.xlu0 %876
        %880 = vrot.lane.b32.xlu0 %v869, 24
        %v881 = vpop.permute.xlu0 %880
        %v883 = vsel %vm614, %v674, %v873
        %vm884 = vcmask 130048
        %v885 = vsel %vm884, %v883, %v877
        %vm886 = vcmask 195584
        %v887 = vsel %vm886, %v885, %v881
        %v888 = vld [vmem:[%s1 + $0x1] sm:$0x1]
        %v889 = vperm.slane %v888, 0
        %891 = vrot.lane.b32.xlu0 %v607, 96
        %v892 = vpop.permute.xlu0 %891
        %v893 = vsel %vm614, %v607, 0
        %v895 = vsel %vm614, %v892, 0
        %897 = vmatpush.xpose.msra.mxu0 0.0
        %898 = vmatpush.xpose.msra.mxu0 0.0
        %899 = vmatpush.xpose.msra.mxu0 0.0
        %900 = vmatpush.xpose.msra.mxu0 0.0
        %901 = vmatpush.xpose.msra.mxu0 0.0
        %902 = vmatpush.xpose.msra.mxu0 0.0
        %903 = vmatpush.xpose.msra.mxu0 0.0
        %904 = vmatpush.xpose.msra.mxu0 0.0
        %905 = vmatpush.xpose.msra.mxu0 0.0
        %906 = vmatpush.xpose.msra.mxu0 0.0
        %907 = vmatpush.xpose.msra.mxu0 0.0
        %908 = vmatpush.xpose.msra.mxu0 0.0
        %909 = vmatpush.xpose.msra.mxu0 0.0
        %910 = vmatpush.xpose.msra.mxu0 0.0
        %911 = vmatpush.xpose.msra.mxu0 0.0
        %912 = vmatpush.xpose.msra.mxu0 %v895
        %913 = vmatmul.f32.gmra.mxu0 %v893
        %v914 = vpop.f32.mrf.mxu0
        %v915 = vadd.f32 %v889, %v914
        %916 = vdwg.mxu0
        %v917 = vsel %vm614, %v915, -inf
        %918 = vmax.xlane.f32.xlu0 %v917
        %v919 = vpop.xlane.xlu0 %918
        %v920 = vsub.f32 %v915, %v919
        %v921 = vmul.f32 %v920, 1.442695
        %v922 = vpow.pop %v921
        %v923 = vsel %vm614, %v922, 0.0
        %924 = vadd.xlane.f32.xlu0 %v923
        %v925 = vpop.xlane.xlu0 %924
        %v926 = vrcp.pop %v925
        %v927 = vmul.f32 %v922, %v926
        %928 = vrot.lane.b32.xlu0 %v607, 64
        %v929 = vpop.permute.xlu0 %928
        %v932 = vsel %vm614, %v927, 0
        %934 = vmatpush.msra.mxu0 0.0
        %935 = vmatpush.msra.mxu0 0.0
        %936 = vmatpush.msra.mxu0 0.0
        %937 = vmatpush.msra.mxu0 0.0
        %938 = vmatpush.msra.mxu0 0.0
        %939 = vmatpush.msra.mxu0 0.0
        %940 = vmatpush.msra.mxu0 0.0
        %941 = vmatpush.msra.mxu0 0.0
        %942 = vmatpush.msra.mxu0 0.0
        %943 = vmatpush.msra.mxu0 0.0
        %944 = vmatpush.msra.mxu0 0.0
        %945 = vmatpush.msra.mxu0 0.0
        %946 = vmatpush.msra.mxu0 0.0
        %947 = vmatpush.msra.mxu0 0.0
        %948 = vmatpush.msra.mxu0 0.0
        %949 = vmatpush.msra.mxu0 %v929
        %950 = vmatmul.f32.gmra.mxu0 %v932
        %v951 = vpop.f32.mrf.mxu0
        %v952 = vadd.f32 0.0, %v951
        %953 = vdwg.mxu0
        %954 = vrot.lane.b32.xlu0 %v607, 120
        %v955 = vpop.permute.xlu0 %954
        %956 = vrot.lane.b32.xlu0 %v607, 88
        %v957 = vpop.permute.xlu0 %956
        %v958 = vsel %vm614, %v955, 0
        %v960 = vsel %vm614, %v957, 0
        %962 = vmatpush.xpose.msra.mxu0 0.0
        %963 = vmatpush.xpose.msra.mxu0 0.0
        %964 = vmatpush.xpose.msra.mxu0 0.0
        %965 = vmatpush.xpose.msra.mxu0 0.0
        %966 = vmatpush.xpose.msra.mxu0 0.0
        %967 = vmatpush.xpose.msra.mxu0 0.0
        %968 = vmatpush.xpose.msra.mxu0 0.0
        %969 = vmatpush.xpose.msra.mxu0 0.0
        %970 = vmatpush.xpose.msra.mxu0 0.0
        %971 = vmatpush.xpose.msra.mxu0 0.0
        %972 = vmatpush.xpose.msra.mxu0 0.0
        %973 = vmatpush.xpose.msra.mxu0 0.0
        %974 = vmatpush.xpose.msra.mxu0 0.0
        %975 = vmatpush.xpose.msra.mxu0 0.0
        %976 = vmatpush.xpose.msra.mxu0 0.0
        %977 = vmatpush.xpose.msra.mxu0 %v960
        %978 = vmatmul.f32.gmra.mxu0 %v958
        %v979 = vpop.f32.mrf.mxu0
        %v980 = vadd.f32 %v889, %v979
        %981 = vdwg.mxu0
        %v982 = vsel %vm614, %v980, -inf
        %983 = vmax.xlane.f32.xlu0 %v982
        %v984 = vpop.xlane.xlu0 %983
        %v985 = vsub.f32 %v980, %v984
        %v986 = vmul.f32 %v985, 1.442695
        %v987 = vpow.pop %v986
        %v988 = vsel %vm614, %v987, 0.0
        %989 = vadd.xlane.f32.xlu0 %v988
        %v990 = vpop.xlane.xlu0 %989
        %v991 = vrcp.pop %v990
        %v992 = vmul.f32 %v987, %v991
        %993 = vrot.lane.b32.xlu0 %v607, 56
        %v994 = vpop.permute.xlu0 %993
        %v997 = vsel %vm614, %v992, 0
        %999 = vmatpush.msra.mxu0 0.0
        %1000 = vmatpush.msra.mxu0 0.0
        %1001 = vmatpush.msra.mxu0 0.0
        %1002 = vmatpush.msra.mxu0 0.0
        %1003 = vmatpush.msra.mxu0 0.0
        %1004 = vmatpush.msra.mxu0 0.0
        %1005 = vmatpush.msra.mxu0 0.0
        %1006 = vmatpush.msra.mxu0 0.0
        %1007 = vmatpush.msra.mxu0 0.0
        %1008 = vmatpush.msra.mxu0 0.0
        %1009 = vmatpush.msra.mxu0 0.0
        %1010 = vmatpush.msra.mxu0 0.0
        %1011 = vmatpush.msra.mxu0 0.0
        %1012 = vmatpush.msra.mxu0 0.0
        %1013 = vmatpush.msra.mxu0 0.0
        %1014 = vmatpush.msra.mxu0 %v994
        %1015 = vmatmul.f32.gmra.mxu0 %v997
        %v1016 = vpop.f32.mrf.mxu0
        %v1017 = vadd.f32 0.0, %v1016
        %1018 = vdwg.mxu0
        %1019 = vrot.lane.b32.xlu0 %v607, 112
        %v1020 = vpop.permute.xlu0 %1019
        %1021 = vrot.lane.b32.xlu0 %v607, 80
        %v1022 = vpop.permute.xlu0 %1021
        %v1023 = vsel %vm614, %v1020, 0
        %v1025 = vsel %vm614, %v1022, 0
        %1027 = vmatpush.xpose.msra.mxu0 0.0
        %1028 = vmatpush.xpose.msra.mxu0 0.0
        %1029 = vmatpush.xpose.msra.mxu0 0.0
        %1030 = vmatpush.xpose.msra.mxu0 0.0
        %1031 = vmatpush.xpose.msra.mxu0 0.0
        %1032 = vmatpush.xpose.msra.mxu0 0.0
        %1033 = vmatpush.xpose.msra.mxu0 0.0
        %1034 = vmatpush.xpose.msra.mxu0 0.0
        %1035 = vmatpush.xpose.msra.mxu0 0.0
        %1036 = vmatpush.xpose.msra.mxu0 0.0
        %1037 = vmatpush.xpose.msra.mxu0 0.0
        %1038 = vmatpush.xpose.msra.mxu0 0.0
        %1039 = vmatpush.xpose.msra.mxu0 0.0
        %1040 = vmatpush.xpose.msra.mxu0 0.0
        %1041 = vmatpush.xpose.msra.mxu0 0.0
        %1042 = vmatpush.xpose.msra.mxu0 %v1025
        %1043 = vmatmul.f32.gmra.mxu0 %v1023
        %v1044 = vpop.f32.mrf.mxu0
        %v1045 = vadd.f32 %v889, %v1044
        %1046 = vdwg.mxu0
        %v1047 = vsel %vm614, %v1045, -inf
        %1048 = vmax.xlane.f32.xlu0 %v1047
        %v1049 = vpop.xlane.xlu0 %1048
        %v1050 = vsub.f32 %v1045, %v1049
        %v1051 = vmul.f32 %v1050, 1.442695
        %v1052 = vpow.pop %v1051
        %v1053 = vsel %vm614, %v1052, 0.0
        %1054 = vadd.xlane.f32.xlu0 %v1053
        %v1055 = vpop.xlane.xlu0 %1054
        %v1056 = vrcp.pop %v1055
        %v1057 = vmul.f32 %v1052, %v1056
        %1058 = vrot.lane.b32.xlu0 %v607, 48
        %v1059 = vpop.permute.xlu0 %1058
        %v1062 = vsel %vm614, %v1057, 0
        %1064 = vmatpush.msra.mxu0 0.0
        %1065 = vmatpush.msra.mxu0 0.0
        %1066 = vmatpush.msra.mxu0 0.0
        %1067 = vmatpush.msra.mxu0 0.0
        %1068 = vmatpush.msra.mxu0 0.0
        %1069 = vmatpush.msra.mxu0 0.0
        %1070 = vmatpush.msra.mxu0 0.0
        %1071 = vmatpush.msra.mxu0 0.0
        %1072 = vmatpush.msra.mxu0 0.0
        %1073 = vmatpush.msra.mxu0 0.0
        %1074 = vmatpush.msra.mxu0 0.0
        %1075 = vmatpush.msra.mxu0 0.0
        %1076 = vmatpush.msra.mxu0 0.0
        %1077 = vmatpush.msra.mxu0 0.0
        %1078 = vmatpush.msra.mxu0 0.0
        %1079 = vmatpush.msra.mxu0 %v1059
        %1080 = vmatmul.f32.gmra.mxu0 %v1062
        %v1081 = vpop.f32.mrf.mxu0
        %v1082 = vadd.f32 0.0, %v1081
        %1083 = vdwg.mxu0
        %1084 = vrot.lane.b32.xlu0 %v607, 104
        %v1085 = vpop.permute.xlu0 %1084
        %1086 = vrot.lane.b32.xlu0 %v607, 72
        %v1087 = vpop.permute.xlu0 %1086
        %v1088 = vsel %vm614, %v1085, 0
        %v1090 = vsel %vm614, %v1087, 0
        %1092 = vmatpush.xpose.msra.mxu0 0.0
        %1093 = vmatpush.xpose.msra.mxu0 0.0
        %1094 = vmatpush.xpose.msra.mxu0 0.0
        %1095 = vmatpush.xpose.msra.mxu0 0.0
        %1096 = vmatpush.xpose.msra.mxu0 0.0
        %1097 = vmatpush.xpose.msra.mxu0 0.0
        %1098 = vmatpush.xpose.msra.mxu0 0.0
        %1099 = vmatpush.xpose.msra.mxu0 0.0
        %1100 = vmatpush.xpose.msra.mxu0 0.0
        %1101 = vmatpush.xpose.msra.mxu0 0.0
        %1102 = vmatpush.xpose.msra.mxu0 0.0
        %1103 = vmatpush.xpose.msra.mxu0 0.0
        %1104 = vmatpush.xpose.msra.mxu0 0.0
        %1105 = vmatpush.xpose.msra.mxu0 0.0
        %1106 = vmatpush.xpose.msra.mxu0 0.0
        %1107 = vmatpush.xpose.msra.mxu0 %v1090
        %1108 = vmatmul.f32.gmra.mxu0 %v1088
        %v1109 = vpop.f32.mrf.mxu0
        %v1110 = vadd.f32 %v889, %v1109
        %1111 = vdwg.mxu0
        %v1112 = vsel %vm614, %v1110, -inf
        %1113 = vmax.xlane.f32.xlu0 %v1112
        %v1114 = vpop.xlane.xlu0 %1113
        %v1115 = vsub.f32 %v1110, %v1114
        %v1116 = vmul.f32 %v1115, 1.442695
        %v1117 = vpow.pop %v1116
        %v1118 = vsel %vm614, %v1117, 0.0
        %1119 = vadd.xlane.f32.xlu0 %v1118
        %v1120 = vpop.xlane.xlu0 %1119
        %v1121 = vrcp.pop %v1120
        %v1122 = vmul.f32 %v1117, %v1121
        %1123 = vrot.lane.b32.xlu0 %v607, 40
        %v1124 = vpop.permute.xlu0 %1123
        %v1127 = vsel %vm614, %v1122, 0
        %1129 = vmatpush.msra.mxu0 0.0
        %1130 = vmatpush.msra.mxu0 0.0
        %1131 = vmatpush.msra.mxu0 0.0
        %1132 = vmatpush.msra.mxu0 0.0
        %1133 = vmatpush.msra.mxu0 0.0
        %1134 = vmatpush.msra.mxu0 0.0
        %1135 = vmatpush.msra.mxu0 0.0
        %1136 = vmatpush.msra.mxu0 0.0
        %1137 = vmatpush.msra.mxu0 0.0
        %1138 = vmatpush.msra.mxu0 0.0
        %1139 = vmatpush.msra.mxu0 0.0
        %1140 = vmatpush.msra.mxu0 0.0
        %1141 = vmatpush.msra.mxu0 0.0
        %1142 = vmatpush.msra.mxu0 0.0
        %1143 = vmatpush.msra.mxu0 0.0
        %1144 = vmatpush.msra.mxu0 %v1124
        %1145 = vmatmul.f32.gmra.mxu0 %v1127
        %v1146 = vpop.f32.mrf.mxu0
        %v1147 = vadd.f32 0.0, %v1146
        %1148 = vdwg.mxu0
        %1150 = vrot.lane.b32.xlu0 %v1017, 8
        %v1151 = vpop.permute.xlu0 %1150
        %1154 = vrot.lane.b32.xlu0 %v1082, 16
        %v1155 = vpop.permute.xlu0 %1154
        %1158 = vrot.lane.b32.xlu0 %v1147, 24
        %v1159 = vpop.permute.xlu0 %1158
        %v1161 = vsel %vm614, %v952, %v1151
        %v1162 = vsel %vm884, %v1161, %v1155
        %v1163 = vsel %vm886, %v1162, %v1159
        %v1164 = vld [vmem:[%s488] sm:$0xff]
        %v1165 = vld [vmem:[%s488 + $0x8] sm:$0xff]
        %v1166 = vld [vmem:[%s488 + $0x10] sm:$0xff]
        %v1167 = vld [vmem:[%s488 + $0x18] sm:$0xff]
        %v1168 = vperm.slane %v573, 1
        %v1170 = vsel %vm579, %v887, 0
        %v1173 = vsel %vm579, %v1163, 0
        %1175 = vmatpush.msra.mxu0 0.0
        %1176 = vmatpush.msra.mxu0 0.0
        %1177 = vmatpush.msra.mxu0 0.0
        %1178 = vmatpush.msra.mxu0 0.0
        %1179 = vmatpush.msra.mxu0 0.0
        %1180 = vmatpush.msra.mxu0 0.0
        %1181 = vmatpush.msra.mxu0 0.0
        %1182 = vmatpush.msra.mxu0 0.0
        %1183 = vmatpush.msra.mxu0 0.0
        %1184 = vmatpush.msra.mxu0 0.0
        %1185 = vmatpush.msra.mxu0 0.0
        %1186 = vmatpush.msra.mxu0 0.0
        %1187 = vmatpush.msra.mxu0 %v1167
        %1188 = vmatpush.msra.mxu0 %v1166
        %1189 = vmatpush.msra.mxu0 %v1165
        %1190 = vmatpush.msra.mxu0 %v1164
        %1191 = vmatmul.f32.gmra.mxu0 %v1170
        %v1192 = vpop.f32.mrf.mxu0
        %v1193 = vadd.f32 %v1168, %v1192
        %1194 = vmatmul.f32.gmra.mxu0 %v1173
        %v1195 = vpop.f32.mrf.mxu0
        %v1196 = vadd.f32 %v1168, %v1195
        %1197 = vdwg.mxu0
        %v1198 = vadd.f32 %v1193, %v571
        %v1199 = vadd.f32 %v1196, %v572
        %v1200 = vsel %vm579, %v1198, 0.0
        %1201 = vadd.xlane.f32.xlu0 %v1200
        %v1202 = vpop.xlane.xlu0 %1201
        %v1203 = vsel %vm579, %v1199, 0.0
        %1204 = vadd.xlane.f32.xlu0 %v1203
        %v1205 = vpop.xlane.xlu0 %1204
        %v1206 = vrcp.pop 32.0
        %v1207 = vmul.f32 32.0, %v1206
        %v1208 = vsub.f32 1.0, %v1207
        %v1209 = vmul.f32 %v1206, %v1208
        %v1210 = vadd.f32 %v1206, %v1209
        %vm1211 = vweird.f32 %v1206
        %v1212 = vsel %vm1211, %v1206, %v1210
        %v1213 = vmul.f32 %v1202, %v1212
        %v1214 = vmul.f32 %v1205, %v1212
        %v1215 = vsub.f32 %v1198, %v1213
        %v1216 = vsub.f32 %v1199, %v1214
        %v1217 = vmul.f32 %v1215, %v1215
        %v1218 = vmul.f32 %v1216, %v1216
        %v1219 = vsel %vm579, %v1217, 0.0
        %1220 = vadd.xlane.f32.xlu0 %v1219
        %v1221 = vpop.xlane.xlu0 %1220
        %v1222 = vsel %vm579, %v1218, 0.0
        %1223 = vadd.xlane.f32.xlu0 %v1222
        %v1224 = vpop.xlane.xlu0 %1223
        %v1225 = vmul.f32 %v1221, %v1212
        %v1226 = vmul.f32 %v1224, %v1212
        %v1227 = vadd.f32 %v1225, 1e-12
        %v1228 = vadd.f32 %v1226, 1e-12
        %v1229 = vrsqrt.pop %v1227
        %v1230 = vmul.f32 %v1229, %v1227
        %v1231 = vmul.f32 %v1230, %v1229
        %v1232 = vmul.f32 0.5, %v1231
        %v1233 = vsub.f32 1.5, %v1232
        %v1234 = vmul.f32 %v1229, %v1233
        %vm1235 = vweird.f32 %v1227
        %vm1236 = vweird.f32 %v1229
        %vm1237 = vmor %vm1235, %vm1236
        %v1238 = vsel %vm1237, %v1229, %v1234
        %v1239 = vrsqrt.pop %v1228
        %v1240 = vmul.f32 %v1239, %v1228
        %v1241 = vmul.f32 %v1240, %v1239
        %v1242 = vmul.f32 0.5, %v1241
        %v1243 = vsub.f32 1.5, %v1242
        %v1244 = vmul.f32 %v1239, %v1243
        %vm1245 = vweird.f32 %v1228
        %vm1246 = vweird.f32 %v1239
        %vm1247 = vmor %vm1245, %vm1246
        %v1248 = vsel %vm1247, %v1239, %v1244
        %v1249 = vmul.f32 %v1215, %v1238
        %v1250 = vmul.f32 %v1216, %v1248
        %v1251 = vperm.slane %v573, 2
        %v1252 = vmul.f32 %v1249, %v1251
        %v1253 = vmul.f32 %v1250, %v1251
        %v1254 = vperm.slane %v573, 3
        %v1255 = vadd.f32 %v1252, %v1254
        %v1256 = vadd.f32 %v1253, %v1254
        %v1257 = vld [vmem:[%s493] sm:$0xff]
        %v1258 = vld [vmem:[%s493 + $0x8] sm:$0xff]
        %v1259 = vld [vmem:[%s493 + $0x10] sm:$0xff]
        %v1260 = vld [vmem:[%s493 + $0x18] sm:$0xff]
        %v1261 = vperm.slane %v573, 4
        %v1263 = vsel %vm579, %v1255, 0
        %v1266 = vsel %vm579, %v1256, 0
        %1268 = vmatpush.msra.mxu0 0.0
        %1269 = vmatpush.msra.mxu0 0.0
        %1270 = vmatpush.msra.mxu0 0.0
        %1271 = vmatpush.msra.mxu0 0.0
        %1272 = vmatpush.msra.mxu0 0.0
        %1273 = vmatpush.msra.mxu0 0.0
        %1274 = vmatpush.msra.mxu0 0.0
        %1275 = vmatpush.msra.mxu0 0.0
        %1276 = vmatpush.msra.mxu0 0.0
        %1277 = vmatpush.msra.mxu0 0.0
        %1278 = vmatpush.msra.mxu0 0.0
        %1279 = vmatpush.msra.mxu0 0.0
        %1280 = vmatpush.msra.mxu0 %v1260
        %1281 = vmatpush.msra.mxu0 %v1259
        %1282 = vmatpush.msra.mxu0 %v1258
        %1283 = vmatpush.msra.mxu0 %v1257
        %1284 = vmatmul.f32.gmra.mxu0 %v1263
        %v1285 = vpop.f32.mrf.mxu0
        %v1286 = vadd.f32 %v1261, %v1285
        %1287 = vmatmul.f32.gmra.mxu0 %v1266
        %v1288 = vpop.f32.mrf.mxu0
        %v1289 = vadd.f32 %v1261, %v1288
        %1290 = vdwg.mxu0
        %v1291 = vmul.f32 %v1286, 0.5
        %v1292 = vmul.f32 %v1289, 0.5
        %v1293 = vmul.f32 %v1286, 0.70710677
        %v1294 = vmul.f32 %v1289, 0.70710677
        %v1295 = vmul.f32 %v1293, %v1293
        %v1296 = vmin.f32 16.0, %v1295
        %v1297 = vmul.f32 %v1296, 2.1237322e-06
        %v1298 = vadd.f32 %v1297, 0.00028619796
        %v1299 = vmul.f32 %v1296, %v1298
        %v1300 = vadd.f32 %v1299, 0.0036580483
        %v1301 = vmul.f32 %v1296, %v1300
        %v1302 = vadd.f32 %v1301, 0.05243302
        %v1303 = vmul.f32 %v1296, %v1302
        %v1304 = vadd.f32 %v1303, 0.18741608
        %v1305 = vmul.f32 %v1296, %v1304
        %v1306 = vadd.f32 %v1305, 1.1283791
        %v1307 = vmul.f32 %v1293, %v1306
        %v1308 = vmul.f32 %v1296, 3.8918573e-05
        %v1309 = vadd.f32 %v1308, 0.001143296
        %v1310 = vmul.f32 %v1296, %v1309
        %v1311 = vadd.f32 %v1310, 0.014752088
        %v1312 = vmul.f32 %v1296, %v1311
        %v1313 = vadd.f32 %v1312, 0.112945676
        %v1314 = vmul.f32 %v1296, %v1313
        %v1315 = vadd.f32 %v1314, 0.4994258
        %v1316 = vmul.f32 %v1296, %v1315
        %v1317 = vadd.f32 %v1316, 1.0
        %v1318 = vrcp.pop %v1317
        %v1319 = vmul.f32 %v1317, %v1318
        %v1320 = vsub.f32 1.0, %v1319
        %v1321 = vmul.f32 %v1318, %v1320
        %v1322 = vadd.f32 %v1318, %v1321
        %vm1323 = vweird.f32 %v1317
        %vm1324 = vweird.f32 %v1318
        %vm1325 = vmor %vm1323, %vm1324
        %v1326 = vsel %vm1325, %v1318, %v1322
        %v1327 = vand.u32 2147483647, %v1317
        %vm1328 = vcmp.eq.f32.partialorder %v1327, 8.507059e+37
        %v1329 = vand.u32 %v1317, 2147483648
        %v1330 = vor.u32 1.1754944e-38, %v1329
        %v1331 = vsel %vm1328, %v1330, %v1326
        %v1332 = vmul.f32 %v1307, %v1331
        %v1333 = vmin.f32 %v1332, 1.0
        %v1334 = vmax.f32 %v1333, -1.0
        %v1335 = vmul.f32 %v1294, %v1294
        %v1336 = vmin.f32 16.0, %v1335
        %v1337 = vmul.f32 %v1336, 2.1237322e-06
        %v1338 = vadd.f32 %v1337, 0.00028619796
        %v1339 = vmul.f32 %v1336, %v1338
        %v1340 = vadd.f32 %v1339, 0.0036580483
        %v1341 = vmul.f32 %v1336, %v1340
        %v1342 = vadd.f32 %v1341, 0.05243302
        %v1343 = vmul.f32 %v1336, %v1342
        %v1344 = vadd.f32 %v1343, 0.18741608
        %v1345 = vmul.f32 %v1336, %v1344
        %v1346 = vadd.f32 %v1345, 1.1283791
        %v1347 = vmul.f32 %v1294, %v1346
        %v1348 = vmul.f32 %v1336, 3.8918573e-05
        %v1349 = vadd.f32 %v1348, 0.001143296
        %v1350 = vmul.f32 %v1336, %v1349
        %v1351 = vadd.f32 %v1350, 0.014752088
        %v1352 = vmul.f32 %v1336, %v1351
        %v1353 = vadd.f32 %v1352, 0.112945676
        %v1354 = vmul.f32 %v1336, %v1353
        %v1355 = vadd.f32 %v1354, 0.4994258
        %v1356 = vmul.f32 %v1336, %v1355
        %v1357 = vadd.f32 %v1356, 1.0
        %v1358 = vrcp.pop %v1357
        %v1359 = vmul.f32 %v1357, %v1358
        %v1360 = vsub.f32 1.0, %v1359
        %v1361 = vmul.f32 %v1358, %v1360
        %v1362 = vadd.f32 %v1358, %v1361
        %vm1363 = vweird.f32 %v1357
        %vm1364 = vweird.f32 %v1358
        %vm1365 = vmor %vm1363, %vm1364
        %v1366 = vsel %vm1365, %v1358, %v1362
        %v1367 = vand.u32 2147483647, %v1357
        %vm1368 = vcmp.eq.f32.partialorder %v1367, 8.507059e+37
        %v1369 = vand.u32 %v1357, 2147483648
        %v1370 = vor.u32 1.1754944e-38, %v1369
        %v1371 = vsel %vm1368, %v1370, %v1366
        %v1372 = vmul.f32 %v1347, %v1371
        %v1373 = vmin.f32 %v1372, 1.0
        %v1374 = vmax.f32 %v1373, -1.0
        %v1375 = vadd.f32 %v1334, 1.0
        %v1376 = vadd.f32 %v1374, 1.0
        %v1377 = vmul.f32 %v1291, %v1375
        %v1378 = vmul.f32 %v1292, %v1376
        %v1379 = vld [vmem:[%s498] sm:$0xff]
        %v1380 = vld [vmem:[%s498 + $0x8] sm:$0xff]
        %v1381 = vld [vmem:[%s498 + $0x10] sm:$0xff]
        %v1382 = vld [vmem:[%s498 + $0x18] sm:$0xff]
        %v1383 = vld [vmem:[%s498 + $0x20] sm:$0xff]
        %v1384 = vld [vmem:[%s498 + $0x28] sm:$0xff]
        %v1385 = vld [vmem:[%s498 + $0x30] sm:$0xff]
        %v1386 = vld [vmem:[%s498 + $0x38] sm:$0xff]
        %v1387 = vld [vmem:[%s498 + $0x40] sm:$0xff]
        %v1388 = vld [vmem:[%s498 + $0x48] sm:$0xff]
        %v1389 = vld [vmem:[%s498 + $0x50] sm:$0xff]
        %v1390 = vld [vmem:[%s498 + $0x58] sm:$0xff]
        %v1391 = vld [vmem:[%s498 + $0x60] sm:$0xff]
        %v1392 = vld [vmem:[%s498 + $0x68] sm:$0xff]
        %v1393 = vld [vmem:[%s498 + $0x70] sm:$0xff]
        %v1394 = vld [vmem:[%s498 + $0x78] sm:$0xff]
        %v1395 = vperm.slane %v573, 5
        %1396 = vmatpush.msra.mxu0 %v1394
        %1397 = vmatpush.msra.mxu0 %v1393
        %1398 = vmatpush.msra.mxu0 %v1392
        %1399 = vmatpush.msra.mxu0 %v1391
        %1400 = vmatpush.msra.mxu0 %v1390
        %1401 = vmatpush.msra.mxu0 %v1389
        %1402 = vmatpush.msra.mxu0 %v1388
        %1403 = vmatpush.msra.mxu0 %v1387
        %1404 = vmatpush.msra.mxu0 %v1386
        %1405 = vmatpush.msra.mxu0 %v1385
        %1406 = vmatpush.msra.mxu0 %v1384
        %1407 = vmatpush.msra.mxu0 %v1383
        %1408 = vmatpush.msra.mxu0 %v1382
        %1409 = vmatpush.msra.mxu0 %v1381
        %1410 = vmatpush.msra.mxu0 %v1380
        %1411 = vmatpush.msra.mxu0 %v1379
        %1412 = vmatmul.f32.gmra.mxu0 %v1377
        %v1413 = vpop.f32.mrf.mxu0
        %v1414 = vadd.f32 %v1395, %v1413
        %1415 = vmatmul.f32.gmra.mxu0 %v1378
        %v1416 = vpop.f32.mrf.mxu0
        %v1417 = vadd.f32 %v1395, %v1416
        %1418 = vdwg.mxu0
        %v1419 = vadd.f32 %v1414, %v1255
        %v1420 = vadd.f32 %v1417, %v1256
        %v1421 = vsel %vm579, %v1419, 0.0
        %1422 = vadd.xlane.f32.xlu0 %v1421
        %v1423 = vpop.xlane.xlu0 %1422
        %v1424 = vsel %vm579, %v1420, 0.0
        %1425 = vadd.xlane.f32.xlu0 %v1424
        %v1426 = vpop.xlane.xlu0 %1425
        %v1427 = vmul.f32 %v1423, %v1212
        %v1428 = vmul.f32 %v1426, %v1212
        %v1429 = vsub.f32 %v1419, %v1427
        %v1430 = vsub.f32 %v1420, %v1428
        %v1431 = vmul.f32 %v1429, %v1429
        %v1432 = vmul.f32 %v1430, %v1430
        %v1433 = vsel %vm579, %v1431, 0.0
        %1434 = vadd.xlane.f32.xlu0 %v1433
        %v1435 = vpop.xlane.xlu0 %1434
        %v1436 = vsel %vm579, %v1432, 0.0
        %1437 = vadd.xlane.f32.xlu0 %v1436
        %v1438 = vpop.xlane.xlu0 %1437
        %v1439 = vmul.f32 %v1435, %v1212
        %v1440 = vmul.f32 %v1438, %v1212
        %v1441 = vadd.f32 %v1439, 1e-12
        %v1442 = vadd.f32 %v1440, 1e-12
        %v1443 = vrsqrt.pop %v1441
        %v1444 = vmul.f32 %v1443, %v1441
        %v1445 = vmul.f32 %v1444, %v1443
        %v1446 = vmul.f32 0.5, %v1445
        %v1447 = vsub.f32 1.5, %v1446
        %v1448 = vmul.f32 %v1443, %v1447
        %vm1449 = vweird.f32 %v1441
        %vm1450 = vweird.f32 %v1443
        %vm1451 = vmor %vm1449, %vm1450
        %v1452 = vsel %vm1451, %v1443, %v1448
        %v1453 = vrsqrt.pop %v1442
        %v1454 = vmul.f32 %v1453, %v1442
        %v1455 = vmul.f32 %v1454, %v1453
        %v1456 = vmul.f32 0.5, %v1455
        %v1457 = vsub.f32 1.5, %v1456
        %v1458 = vmul.f32 %v1453, %v1457
        %vm1459 = vweird.f32 %v1442
        %vm1460 = vweird.f32 %v1453
        %vm1461 = vmor %vm1459, %vm1460
        %v1462 = vsel %vm1461, %v1453, %v1458
        %v1463 = vmul.f32 %v1429, %v1452
        %v1464 = vmul.f32 %v1430, %v1462
        %v1465 = vperm.slane %v573, 6
        %v1466 = vmul.f32 %v1463, %v1465
        %v1467 = vmul.f32 %v1464, %v1465
        %v1468 = vperm.slane %v573, 7
        %v1469 = vadd.f32 %v1466, %v1468
        %v1470 = vadd.f32 %v1467, %v1468
        %1471 = vst.msk [vmem:[#allocation2] sm:$0xff] %vm579, %v1469
        %1472 = vst.msk [vmem:[#allocation2 + $0x8] sm:$0xff] %vm579, %v1470
        %p1473 = scmp.eq.s32.totalorder %s27, 1
        // Predicated region
        $region73: #{finbert_forward.1} parent=67 // pred_check
          %p1474 = pneg %p1473
        $region74: #{finbert_forward.1} parent=67 // pred_check_branch
          %1476 = sbr.rel (%p1474) target = $region76
        $region75: #{finbert_forward.1} parent=67 // pred_region
          %v1478 = vrot.slane %v1470, 7
          %vm1480 = vcmask 1040384
          %v1481 = vsel %vm1480, %v1469, %v1478
          %v1482 = vld [vmem:[%s8] sm:$0xff]
          %v1483 = vld [vmem:[%s8 + $0x8] sm:$0xff]
          %v1484 = vld [vmem:[%s8 + $0x10] sm:$0xff]
          %v1485 = vld [vmem:[%s8 + $0x18] sm:$0xff]
          %v1486 = vld [vmem:[%s9] sm:$0x1]
          %v1488 = vperm.slane %v1486, 0
          %v1491 = vsel %vm579, %v1481, 0
          %1493 = vmatpush.msra.mxu0 0.0
          %1494 = vmatpush.msra.mxu0 0.0
          %1495 = vmatpush.msra.mxu0 0.0
          %1496 = vmatpush.msra.mxu0 0.0
          %1497 = vmatpush.msra.mxu0 0.0
          %1498 = vmatpush.msra.mxu0 0.0
          %1499 = vmatpush.msra.mxu0 0.0
          %1500 = vmatpush.msra.mxu0 0.0
          %1501 = vmatpush.msra.mxu0 0.0
          %1502 = vmatpush.msra.mxu0 0.0
          %1503 = vmatpush.msra.mxu0 0.0
          %1504 = vmatpush.msra.mxu0 0.0
          %1505 = vmatpush.msra.mxu0 %v1485
          %1506 = vmatpush.msra.mxu0 %v1484
          %1507 = vmatpush.msra.mxu0 %v1483
          %1508 = vmatpush.msra.mxu0 %v1482
          %1509 = vmatmul.f32.gmra.mxu0 %v1491
          %v1510 = vpop.f32.mrf.mxu0
          %v1511 = vadd.f32 %v1488, %v1510
          %1512 = vdwg.mxu0
          %v1513 = vtanh.pop %v1511
          %v1514 = vld [vmem:[%s10] sm:$0xff]
          %v1515 = vld [vmem:[%s10 + $0x8] sm:$0xff]
          %v1516 = vld [vmem:[%s10 + $0x10] sm:$0xff]
          %v1517 = vld [vmem:[%s10 + $0x18] sm:$0xff]
          %v1518 = vld [vmem:[%s11] sm:$0x1]
          %v1520 = vperm.slane %v1518, 0
          %v1523 = vsel %vm579, %v1513, 0
          %1525 = vmatpush.msra.mxu0 0.0
          %1526 = vmatpush.msra.mxu0 0.0
          %1527 = vmatpush.msra.mxu0 0.0
          %1528 = vmatpush.msra.mxu0 0.0
          %1529 = vmatpush.msra.mxu0 0.0
          %1530 = vmatpush.msra.mxu0 0.0
          %1531 = vmatpush.msra.mxu0 0.0
          %1532 = vmatpush.msra.mxu0 0.0
          %1533 = vmatpush.msra.mxu0 0.0
          %1534 = vmatpush.msra.mxu0 0.0
          %1535 = vmatpush.msra.mxu0 0.0
          %1536 = vmatpush.msra.mxu0 0.0
          %1537 = vmatpush.msra.mxu0 %v1517
          %1538 = vmatpush.msra.mxu0 %v1516
          %1539 = vmatpush.msra.mxu0 %v1515
          %1540 = vmatpush.msra.mxu0 %v1514
          %1541 = vmatmul.f32.gmra.mxu0 %v1523
          %v1542 = vpop.f32.mrf.mxu0
          %v1543 = vadd.f32 %v1520, %v1542
          %1544 = vdwg.mxu0
          %vm1545 = vcmask 17408
          %1546 = vst.msk [vmem:[#allocation4] sm:$0x3] %vm1545, %v1543
        $region76: #{finbert_forward.1} parent=67 // pred_fallthru
          _
        // Predicated region
        $region77: #{finbert_forward.1} parent=67 // pred_check
          %p1547 = pneg %p317
        $region78: #{finbert_forward.1} parent=67 // pred_check_branch
          %1549 = sbr.rel (%p1547) target = $region80
        $region79: #{finbert_forward.1} parent=67 // pred_region
          %1551 = vsyncadd [#allocation3], 0
          %s1552 = sshll.u32 [#allocation2], 4
          %s1553 = int_to_ptr.vmem [resolvable:$true] %s1552
          %s1554 = sshll.u32 %s12, 4
          %s1555 = int_to_ptr.hbm [resolvable:$true] %s1554
          %1560 = dma.vmem_to_hbm [thread:$0]  %s1553, 256, %s1555, [#allocation3], 128, 128, 8
        $region80: #{finbert_forward.1} parent=67 // pred_fallthru
          _
        // Predicated region
        $region81: #{finbert_forward.1} parent=67 // pred_check
          %p1561 = pneg %p338
        $region82: #{finbert_forward.1} parent=67 // pred_check_branch
          %1563 = sbr.rel (%p1561) target = $region84
        $region83: #{finbert_forward.1} parent=67 // pred_region
          %1565 = vsyncadd [#allocation5], 0
          %s1567 = sshll.u32 [#allocation4], 4
          %s1568 = int_to_ptr.vmem [resolvable:$true] %s1567
          %s1569 = sshll.u32 %s13, 4
          %s1570 = int_to_ptr.hbm [resolvable:$true] %s1569
          %1572 = dma.vmem_to_hbm [thread:$0]  %s1568, 32, %s1570, [#allocation5]
        $region84: #{finbert_forward.1} parent=67 // pred_fallthru
          _
        // Predicated region
        $region85: #{finbert_forward.1} parent=67 // pred_check
          %p1573 = pneg %p317
        $region86: #{finbert_forward.1} parent=67 // pred_check_branch
          %1575 = sbr.rel (%p1573) target = $region88
        $region87: #{finbert_forward.1} parent=67 // pred_region
          %1577 = dma.done [#allocation3], 256
        $region88: #{finbert_forward.1} parent=67 // pred_fallthru
          _
        // Predicated region
        $region89: #{finbert_forward.1} parent=67 // pred_check
          %p1578 = pneg %p338
        $region90: #{finbert_forward.1} parent=67 // pred_check_branch
          %1580 = sbr.rel (%p1578) target = $region92
        $region91: #{finbert_forward.1} parent=67 // pred_region
          %1582 = dma.done [#allocation5], 32
        $region92: #{finbert_forward.1} parent=67 // pred_fallthru
          _
      $region68: #{finbert_forward.1} parent=5 // pred_fallthru
        _
      %p1583 = scmp.le.s32.totalorder 2, %s22
      // Predicated region
      $region93: #{finbert_forward.1} parent=5 // pred_check
        %p1584 = pneg %p1583
      $region94: #{finbert_forward.1} parent=5 // pred_check_branch
        %1586 = sbr.rel (%p1584) target = $region96
      $region95: #{finbert_forward.1} parent=5 // pred_region
        %s1587 = ssub.s32 %s22, 2
      $region96: #{finbert_forward.1} parent=5 // pred_fallthru
        _
    $region6: #{finbert_forward.1} parent=1 // loop_footer
      %s26 = sadd.s32 1, %s22
    $region7: #{finbert_forward.1} parent=1 // loop_footer_branch
      %21 = sbr.rel target = $region3
    $region8: #{finbert_forward.1} parent=1 // loop_exit
      _
    %1588 = vsyncpa [#allocation3], 1
    %s1589 = scalar_lea.sflag [#allocation3], 1
    %1590 = vsyncpa %s1589, 1
    %1591 = vsyncpa [#allocation5], 1

</llo_original>
